<compile_context>
chip_gen: v6e
topology: v6e:2x2x1
jax: 0.10.0
libtpu: 0.0.40
codegen_flags: <defaults>
</compile_context>

<pallas_src>
import math
import functools

import jax
import jax.numpy as jnp
from jax.experimental import pallas as pl
from jax.experimental.pallas import tpu as pltpu


def _layer_norm(x, gamma, beta, eps=1e-12):
    # Two-pass LN (mean, then variance of the centered values): avoids the
    # catastrophic-cancellation risk of var = E[x^2] - mu^2 at real scales.
    mu = jnp.mean(x, axis=-1, keepdims=True)
    xc = x - mu
    var = jnp.mean(xc * xc, axis=-1, keepdims=True)
    return xc * jax.lax.rsqrt(var + eps) * gamma + beta


def _mini_bert_kernel(emb_size,
                      ids_ref,      # SMEM (B, S) int32   (scalar prefetch)
                      wemb_hbm,     # HBM  (V, H) f32     (pl.ANY, row-gathered)
                      pemb_ref,     # VMEM (S, H) f32     (resident, constant idx)
                      wqkvo_ref,    # VMEM (4, H, H) bf16 [Wq, Wk, Wv, Wo]
                      wffn_ref,     # VMEM (2, H, F) bf16 [W1, W2^T]
                      vech_ref,     # VMEM (11, H) f32    packed (1,H) vectors
                      vecf_ref,     # VMEM (1, F) f32     FFN bias b1
                      out_ref,      # VMEM (S, H) f32     (batch dim squeezed)
                      emb_buf,      # VMEM (S, H) f32 scratch (gathered rows)
                      sem):         # DMA semaphores (S,)
    b = pl.program_id(0)
    S, H = pemb_ref.shape

    # ---- embedding lookup: DMA row gather from HBM (no one-hot matmul) ------
    copies = []
    for s in range(S):                       # S static & small -> unrolled
        tok = ids_ref[b, s]
        cp = pltpu.make_async_copy(wemb_hbm.at[pl.ds(tok, 1), :],
                                   emb_buf.at[pl.ds(s, 1), :],
                                   sem.at[s])
        cp.start()
        copies.append(cp)
    for cp in copies:
        cp.wait()

    x = emb_buf[...] + pemb_ref[...]
    x = _layer_norm(x, vech_ref[0:1, :], vech_ref[1:2, :])

    # ---- single-head self-attention over this sequence only -----------------
    xb = x.astype(jnp.bfloat16)
    q = jnp.dot(xb, wqkvo_ref[0], preferred_element_type=jnp.float32) + vech_ref[2:3, :]
    k = jnp.dot(xb, wqkvo_ref[1], preferred_element_type=jnp.float32) + vech_ref[3:4, :]
    v = jnp.dot(xb, wqkvo_ref[2], preferred_element_type=jnp.float32) + vech_ref[4:5, :]
    # contract last dims of q and k directly (no XLU transpose of k)
    scores = jax.lax.dot_general(q.astype(jnp.bfloat16), k.astype(jnp.bfloat16),
                                 (((1,), (1,)), ((), ())),
                                 preferred_element_type=jnp.float32)   # (S, S)
    scores = scores * (1.0 / math.sqrt(H))
    scores = scores - jnp.max(scores, axis=-1, keepdims=True)
    p = jnp.exp(scores)
    p = p / jnp.sum(p, axis=-1, keepdims=True)          # exact softmax denom
    ctx = jnp.dot(p.astype(jnp.bfloat16), v.astype(jnp.bfloat16),
                  preferred_element_type=jnp.float32)
    attn = jnp.dot(ctx.astype(jnp.bfloat16), wqkvo_ref[3],
                   preferred_element_type=jnp.float32) + vech_ref[5:6, :]
    x = _layer_norm(x + attn, vech_ref[6:7, :], vech_ref[7:8, :])

    # ---- feed-forward (W2 stored transposed: both dots contract last dim) ---
    h = jnp.dot(x.astype(jnp.bfloat16), wffn_ref[0],
                preferred_element_type=jnp.float32) + vecf_ref[...]
    # TODO(synk): HF mBERT uses exact erf GELU; tanh approx kept for robust lowering.
    h = jax.nn.gelu(h, approximate=True)
    ffn = jax.lax.dot_general(h.astype(jnp.bfloat16), wffn_ref[1],
                              (((1,), (1,)), ((), ())),
                              preferred_element_type=jnp.float32) + vech_ref[8:9, :]
    x = _layer_norm(x + ffn, vech_ref[9:10, :], vech_ref[10:11, :])

    # ---- TokenEmbedding scaling fused in; lane-dense contiguous store -------
    out_ref[...] = (x * math.sqrt(emb_size)).astype(out_ref.dtype)


_VECH_ORDER = ["ln0_g", "ln0_b", "bq", "bk", "bv", "bo",
               "ln1_g", "ln1_b", "b2", "ln2_g", "ln2_b"]


def token_embedding_forward(tokens, params, emb_size):
    """tokens: (S, B) or (S,) integer ids. Returns (S, B, H) float32."""
    if tokens.ndim == 1:                            # mirrors tokens.unsqueeze(-1)
        tokens = tokens[:, None]                    # (S,) -> (S, 1)
    ids = jnp.transpose(tokens).astype(jnp.int32)   # (B, S), mirrors tokens.long().T
    B, S = ids.shape
    V, H = params["wemb"].shape
    F = params["w1"].shape[1]

    # Host-side packing: bf16 weight slabs for the MXU, f32 biases/LN vectors.
    wemb = params["wemb"].astype(jnp.float32)                          # HBM table
    pemb = params["pemb"][:S].astype(jnp.float32)                      # (S, H)
    wqkvo = jnp.stack([params["wq"], params["wk"], params["wv"],
                       params["wo"]]).astype(jnp.bfloat16)             # (4, H, H)
    wffn = jnp.stack([params["w1"],
                      jnp.transpose(params["w2"])]).astype(jnp.bfloat16)  # (2, H, F)
    vech = jnp.concatenate([params[n] for n in _VECH_ORDER], axis=0)   # (11, H)
    vecf = params["b1"]                                                # (1, F)

    kernel = functools.partial(_mini_bert_kernel, emb_size)
    grid_spec = pltpu.PrefetchScalarGridSpec(
        num_scalar_prefetch=1,                       # ids -> SMEM
        grid=(B,),
        in_specs=[
            pl.BlockSpec(memory_space=pl.ANY),                       # wemb in HBM
            pl.BlockSpec((S, H), lambda b, ids: (0, 0)),             # pemb resident
            pl.BlockSpec((4, H, H), lambda b, ids: (0, 0, 0)),       # weights resident
            pl.BlockSpec((2, H, F), lambda b, ids: (0, 0, 0)),
            pl.BlockSpec((11, H), lambda b, ids: (0, 0)),
            pl.BlockSpec((1, F), lambda b, ids: (0, 0)),
        ],
        out_specs=pl.BlockSpec((None, S, H), lambda b, ids: (b, 0, 0)),
        scratch_shapes=[
            pltpu.VMEM((S, H), jnp.float32),         # gathered embedding rows
            pltpu.SemaphoreType.DMA((S,)),
        ],
    )
    out = pl.pallas_call(
        kernel,
        out_shape=jax.ShapeDtypeStruct((B, S, H), jnp.float32),
        grid_spec=grid_spec,
        compiler_params=pltpu.CompilerParams(
            dimension_semantics=("parallel",),       # shards batch across TCs on v7x
            # TODO(synk): at real H/F scale raise to 64-96 MiB on v5e/v6e (128 MiB
            # physical) and F-tile the FFN on v7x (64 MiB physical).
            vmem_limit_bytes=32 * 1024 * 1024,
        ),
    )(ids, wemb, pemb, wqkvo, wffn, vech, vecf)
    # (B, S, H) -> permute(1, 0, 2) -> (S, B, H)
    return jnp.transpose(out, (1, 0, 2))


def init_params(key, vocab, max_seq, hidden, ffn):
    # TODO(synk): synthetic deterministic weights; the real module freezes a
    # pretrained 12-layer mBERT (only pooler trainable) which is not loadable here.
    ks = jax.random.split(key, 8)
    scale = 0.02
    n = lambda k, shape: (scale * jax.random.normal(k, shape)).astype(jnp.float32)
    ones = lambda shape: jnp.ones(shape, jnp.float32)
    zeros = lambda shape: jnp.zeros(shape, jnp.float32)
    return {
        "wemb": n(ks[0], (vocab, hidden)),
        "pemb": n(ks[1], (max_seq, hidden)),
        "ln0_g": ones((1, hidden)), "ln0_b": zeros((1, hidden)),
        "wq": n(ks[2], (hidden, hidden)), "bq": zeros((1, hidden)),
        "wk": n(ks[3], (hidden, hidden)), "bk": zeros((1, hidden)),
        "wv": n(ks[4], (hidden, hidden)), "bv": zeros((1, hidden)),
        "wo": n(ks[5], (hidden, hidden)), "bo": zeros((1, hidden)),
        "ln1_g": ones((1, hidden)), "ln1_b": zeros((1, hidden)),
        "w1": n(ks[6], (hidden, ffn)), "b1": zeros((1, ffn)),
        "w2": n(ks[7], (ffn, hidden)), "b2": zeros((1, hidden)),
        "ln2_g": ones((1, hidden)), "ln2_b": zeros((1, hidden)),
    }


if __name__ == "__main__":
    # H=128 / F=512 keep the demo lane-dense (unmasked vst, full MXU K width)
    # per the perf review; real mBERT is H=768 / F=3072.
    EMB_SIZE = 128    # hidden size H (== emb_size in the module)
    VOCAB = 512
    SEQ = 8
    BATCH = 2
    FFN = 512
    MAX_SEQ = 16

    key = jax.random.PRNGKey(0)
    pkey, tkey = jax.random.split(key)
    params = init_params(pkey, VOCAB, MAX_SEQ, EMB_SIZE, FFN)

    tokens = jax.random.randint(tkey, (SEQ, BATCH), 0, VOCAB, dtype=jnp.int32)
    out = token_embedding_forward(tokens, params, EMB_SIZE)
    out = jax.block_until_ready(out)

    assert out.shape == (SEQ, BATCH, EMB_SIZE), out.shape
    assert out.dtype == jnp.float32, out.dtype
    assert bool(jnp.all(jnp.isfinite(out)))
    print("KERNEL_OK")
</pallas_src>

<mosaic_0001>
module attributes {stable_mosaic.version = 11 : i64} {
  func.func @_mini_bert_kernel(%arg0: i32, %arg1: memref<2x8xi32, #tpu.memory_space<smem>>, %arg2: memref<512x128xf32, #tpu.memory_space<any>>, %arg3: memref<8x128xf32, #tpu.memory_space<vmem>>, %arg4: memref<4x128x128xbf16, #tpu.memory_space<vmem>>, %arg5: memref<2x128x512xbf16, #tpu.memory_space<vmem>>, %arg6: memref<11x128xf32, #tpu.memory_space<vmem>>, %arg7: memref<1x512xf32, #tpu.memory_space<vmem>>, %arg8: memref<1x8x128xf32, #tpu.memory_space<vmem>>, %arg9: memref<8x128xf32, #tpu.memory_space<vmem>>, %arg10: memref<8x!tpu.dma_semaphore, #tpu.memory_space<semaphore_mem>>) attributes {dimension_semantics = [#tpu.dimension_semantics<parallel>], iteration_bounds = array<i64: 2>, scalar_prefetch = 1 : i64, scratch_operands = 2 : i64, tpu.core_type = #tpu.core_type<tc>, window_params = [{}, {pipeline_mode = #tpu.pipeline_mode<synchronous>, transform_indices = @transform_1, window_bounds = array<i64: 8, 128>}, {pipeline_mode = #tpu.pipeline_mode<synchronous>, transform_indices = @transform_2, window_bounds = array<i64: 4, 128, 128>}, {pipeline_mode = #tpu.pipeline_mode<synchronous>, transform_indices = @transform_3, window_bounds = array<i64: 2, 128, 512>}, {pipeline_mode = #tpu.pipeline_mode<synchronous>, transform_indices = @transform_4, window_bounds = array<i64: 11, 128>}, {pipeline_mode = #tpu.pipeline_mode<synchronous>, transform_indices = @transform_5, window_bounds = array<i64: 1, 512>}, {transform_indices = @transform_6, window_bounds = array<i64: 1, 8, 128>}]} {
    %0 = arith.index_cast %arg0 : i32 to index
    %c0 = arith.constant 0 : index
    %1 = memref.load %arg1[%0, %c0] : memref<2x8xi32, #tpu.memory_space<smem>>
    %c0_i32 = arith.constant 0 : i32
    %c0_i32_0 = arith.constant 0 : i32
    %2 = tpu.memref_slice %arg2[%1, %c0_i32_0] : memref<512x128xf32, #tpu.memory_space<any>> -> memref<1x128xf32, #tpu.memory_space<any>>
    %c0_i32_1 = arith.constant 0 : i32
    %c0_i32_2 = arith.constant 0 : i32
    %3 = tpu.memref_slice %arg9[%c0_i32_1, %c0_i32_2] : memref<8x128xf32, #tpu.memory_space<vmem>> -> memref<1x128xf32, #tpu.memory_space<vmem>>
    %4 = tpu.memref_slice %arg10[%c0_i32] : memref<8x!tpu.dma_semaphore, #tpu.memory_space<semaphore_mem>> -> memref<1x!tpu.dma_semaphore, #tpu.memory_space<semaphore_mem>>
    %5 = tpu.memref_squeeze %4 : memref<1x!tpu.dma_semaphore, #tpu.memory_space<semaphore_mem>> -> memref<!tpu.dma_semaphore, #tpu.memory_space<semaphore_mem>>
    tpu.enqueue_dma source(%2 : memref<1x128xf32, #tpu.memory_space<any>>) target(%3 : memref<1x128xf32, #tpu.memory_space<vmem>>) target_semaphore(%5 : memref<!tpu.dma_semaphore, #tpu.memory_space<semaphore_mem>>)
    %6 = arith.index_cast %arg0 : i32 to index
    %c1 = arith.constant 1 : index
    %7 = memref.load %arg1[%6, %c1] : memref<2x8xi32, #tpu.memory_space<smem>>
    %c1_i32 = arith.constant 1 : i32
    %c0_i32_3 = arith.constant 0 : i32
    %8 = tpu.memref_slice %arg2[%7, %c0_i32_3] : memref<512x128xf32, #tpu.memory_space<any>> -> memref<1x128xf32, #tpu.memory_space<any>>
    %c1_i32_4 = arith.constant 1 : i32
    %c0_i32_5 = arith.constant 0 : i32
    %9 = tpu.memref_slice %arg9[%c1_i32_4, %c0_i32_5] : memref<8x128xf32, #tpu.memory_space<vmem>> -> memref<1x128xf32, #tpu.memory_space<vmem>>
    %10 = tpu.memref_slice %arg10[%c1_i32] : memref<8x!tpu.dma_semaphore, #tpu.memory_space<semaphore_mem>> -> memref<1x!tpu.dma_semaphore, #tpu.memory_space<semaphore_mem>>
    %11 = tpu.memref_squeeze %10 : memref<1x!tpu.dma_semaphore, #tpu.memory_space<semaphore_mem>> -> memref<!tpu.dma_semaphore, #tpu.memory_space<semaphore_mem>>
    tpu.enqueue_dma source(%8 : memref<1x128xf32, #tpu.memory_space<any>>) target(%9 : memref<1x128xf32, #tpu.memory_space<vmem>>) target_semaphore(%11 : memref<!tpu.dma_semaphore, #tpu.memory_space<semaphore_mem>>)
    %12 = arith.index_cast %arg0 : i32 to index
    %c2 = arith.constant 2 : index
    %13 = memref.load %arg1[%12, %c2] : memref<2x8xi32, #tpu.memory_space<smem>>
    %c2_i32 = arith.constant 2 : i32
    %c0_i32_6 = arith.constant 0 : i32
    %14 = tpu.memref_slice %arg2[%13, %c0_i32_6] : memref<512x128xf32, #tpu.memory_space<any>> -> memref<1x128xf32, #tpu.memory_space<any>>
    %c2_i32_7 = arith.constant 2 : i32
    %c0_i32_8 = arith.constant 0 : i32
    %15 = tpu.memref_slice %arg9[%c2_i32_7, %c0_i32_8] : memref<8x128xf32, #tpu.memory_space<vmem>> -> memref<1x128xf32, #tpu.memory_space<vmem>>
    %16 = tpu.memref_slice %arg10[%c2_i32] : memref<8x!tpu.dma_semaphore, #tpu.memory_space<semaphore_mem>> -> memref<1x!tpu.dma_semaphore, #tpu.memory_space<semaphore_mem>>
    %17 = tpu.memref_squeeze %16 : memref<1x!tpu.dma_semaphore, #tpu.memory_space<semaphore_mem>> -> memref<!tpu.dma_semaphore, #tpu.memory_space<semaphore_mem>>
    tpu.enqueue_dma source(%14 : memref<1x128xf32, #tpu.memory_space<any>>) target(%15 : memref<1x128xf32, #tpu.memory_space<vmem>>) target_semaphore(%17 : memref<!tpu.dma_semaphore, #tpu.memory_space<semaphore_mem>>)
    %18 = arith.index_cast %arg0 : i32 to index
    %c3 = arith.constant 3 : index
    %19 = memref.load %arg1[%18, %c3] : memref<2x8xi32, #tpu.memory_space<smem>>
    %c3_i32 = arith.constant 3 : i32
    %c0_i32_9 = arith.constant 0 : i32
    %20 = tpu.memref_slice %arg2[%19, %c0_i32_9] : memref<512x128xf32, #tpu.memory_space<any>> -> memref<1x128xf32, #tpu.memory_space<any>>
    %c3_i32_10 = arith.constant 3 : i32
    %c0_i32_11 = arith.constant 0 : i32
    %21 = tpu.memref_slice %arg9[%c3_i32_10, %c0_i32_11] : memref<8x128xf32, #tpu.memory_space<vmem>> -> memref<1x128xf32, #tpu.memory_space<vmem>>
    %22 = tpu.memref_slice %arg10[%c3_i32] : memref<8x!tpu.dma_semaphore, #tpu.memory_space<semaphore_mem>> -> memref<1x!tpu.dma_semaphore, #tpu.memory_space<semaphore_mem>>
    %23 = tpu.memref_squeeze %22 : memref<1x!tpu.dma_semaphore, #tpu.memory_space<semaphore_mem>> -> memref<!tpu.dma_semaphore, #tpu.memory_space<semaphore_mem>>
    tpu.enqueue_dma source(%20 : memref<1x128xf32, #tpu.memory_space<any>>) target(%21 : memref<1x128xf32, #tpu.memory_space<vmem>>) target_semaphore(%23 : memref<!tpu.dma_semaphore, #tpu.memory_space<semaphore_mem>>)
    %24 = arith.index_cast %arg0 : i32 to index
    %c4 = arith.constant 4 : index
    %25 = memref.load %arg1[%24, %c4] : memref<2x8xi32, #tpu.memory_space<smem>>
    %c4_i32 = arith.constant 4 : i32
    %c0_i32_12 = arith.constant 0 : i32
    %26 = tpu.memref_slice %arg2[%25, %c0_i32_12] : memref<512x128xf32, #tpu.memory_space<any>> -> memref<1x128xf32, #tpu.memory_space<any>>
    %c4_i32_13 = arith.constant 4 : i32
    %c0_i32_14 = arith.constant 0 : i32
    %27 = tpu.memref_slice %arg9[%c4_i32_13, %c0_i32_14] : memref<8x128xf32, #tpu.memory_space<vmem>> -> memref<1x128xf32, #tpu.memory_space<vmem>>
    %28 = tpu.memref_slice %arg10[%c4_i32] : memref<8x!tpu.dma_semaphore, #tpu.memory_space<semaphore_mem>> -> memref<1x!tpu.dma_semaphore, #tpu.memory_space<semaphore_mem>>
    %29 = tpu.memref_squeeze %28 : memref<1x!tpu.dma_semaphore, #tpu.memory_space<semaphore_mem>> -> memref<!tpu.dma_semaphore, #tpu.memory_space<semaphore_mem>>
    tpu.enqueue_dma source(%26 : memref<1x128xf32, #tpu.memory_space<any>>) target(%27 : memref<1x128xf32, #tpu.memory_space<vmem>>) target_semaphore(%29 : memref<!tpu.dma_semaphore, #tpu.memory_space<semaphore_mem>>)
    %30 = arith.index_cast %arg0 : i32 to index
    %c5 = arith.constant 5 : index
    %31 = memref.load %arg1[%30, %c5] : memref<2x8xi32, #tpu.memory_space<smem>>
    %c5_i32 = arith.constant 5 : i32
    %c0_i32_15 = arith.constant 0 : i32
    %32 = tpu.memref_slice %arg2[%31, %c0_i32_15] : memref<512x128xf32, #tpu.memory_space<any>> -> memref<1x128xf32, #tpu.memory_space<any>>
    %c5_i32_16 = arith.constant 5 : i32
    %c0_i32_17 = arith.constant 0 : i32
    %33 = tpu.memref_slice %arg9[%c5_i32_16, %c0_i32_17] : memref<8x128xf32, #tpu.memory_space<vmem>> -> memref<1x128xf32, #tpu.memory_space<vmem>>
    %34 = tpu.memref_slice %arg10[%c5_i32] : memref<8x!tpu.dma_semaphore, #tpu.memory_space<semaphore_mem>> -> memref<1x!tpu.dma_semaphore, #tpu.memory_space<semaphore_mem>>
    %35 = tpu.memref_squeeze %34 : memref<1x!tpu.dma_semaphore, #tpu.memory_space<semaphore_mem>> -> memref<!tpu.dma_semaphore, #tpu.memory_space<semaphore_mem>>
    tpu.enqueue_dma source(%32 : memref<1x128xf32, #tpu.memory_space<any>>) target(%33 : memref<1x128xf32, #tpu.memory_space<vmem>>) target_semaphore(%35 : memref<!tpu.dma_semaphore, #tpu.memory_space<semaphore_mem>>)
    %36 = arith.index_cast %arg0 : i32 to index
    %c6 = arith.constant 6 : index
    %37 = memref.load %arg1[%36, %c6] : memref<2x8xi32, #tpu.memory_space<smem>>
    %c6_i32 = arith.constant 6 : i32
    %c0_i32_18 = arith.constant 0 : i32
    %38 = tpu.memref_slice %arg2[%37, %c0_i32_18] : memref<512x128xf32, #tpu.memory_space<any>> -> memref<1x128xf32, #tpu.memory_space<any>>
    %c6_i32_19 = arith.constant 6 : i32
    %c0_i32_20 = arith.constant 0 : i32
    %39 = tpu.memref_slice %arg9[%c6_i32_19, %c0_i32_20] : memref<8x128xf32, #tpu.memory_space<vmem>> -> memref<1x128xf32, #tpu.memory_space<vmem>>
    %40 = tpu.memref_slice %arg10[%c6_i32] : memref<8x!tpu.dma_semaphore, #tpu.memory_space<semaphore_mem>> -> memref<1x!tpu.dma_semaphore, #tpu.memory_space<semaphore_mem>>
    %41 = tpu.memref_squeeze %40 : memref<1x!tpu.dma_semaphore, #tpu.memory_space<semaphore_mem>> -> memref<!tpu.dma_semaphore, #tpu.memory_space<semaphore_mem>>
    tpu.enqueue_dma source(%38 : memref<1x128xf32, #tpu.memory_space<any>>) target(%39 : memref<1x128xf32, #tpu.memory_space<vmem>>) target_semaphore(%41 : memref<!tpu.dma_semaphore, #tpu.memory_space<semaphore_mem>>)
    %42 = arith.index_cast %arg0 : i32 to index
    %c7 = arith.constant 7 : index
    %43 = memref.load %arg1[%42, %c7] : memref<2x8xi32, #tpu.memory_space<smem>>
    %c7_i32 = arith.constant 7 : i32
    %c0_i32_21 = arith.constant 0 : i32
    %44 = tpu.memref_slice %arg2[%43, %c0_i32_21] : memref<512x128xf32, #tpu.memory_space<any>> -> memref<1x128xf32, #tpu.memory_space<any>>
    %c7_i32_22 = arith.constant 7 : i32
    %c0_i32_23 = arith.constant 0 : i32
    %45 = tpu.memref_slice %arg9[%c7_i32_22, %c0_i32_23] : memref<8x128xf32, #tpu.memory_space<vmem>> -> memref<1x128xf32, #tpu.memory_space<vmem>>
    %46 = tpu.memref_slice %arg10[%c7_i32] : memref<8x!tpu.dma_semaphore, #tpu.memory_space<semaphore_mem>> -> memref<1x!tpu.dma_semaphore, #tpu.memory_space<semaphore_mem>>
    %47 = tpu.memref_squeeze %46 : memref<1x!tpu.dma_semaphore, #tpu.memory_space<semaphore_mem>> -> memref<!tpu.dma_semaphore, #tpu.memory_space<semaphore_mem>>
    tpu.enqueue_dma source(%44 : memref<1x128xf32, #tpu.memory_space<any>>) target(%45 : memref<1x128xf32, #tpu.memory_space<vmem>>) target_semaphore(%47 : memref<!tpu.dma_semaphore, #tpu.memory_space<semaphore_mem>>)
    %c0_i32_24 = arith.constant 0 : i32
    %c0_i32_25 = arith.constant 0 : i32
    %48 = tpu.memref_slice %arg2[%1, %c0_i32_25] : memref<512x128xf32, #tpu.memory_space<any>> -> memref<1x128xf32, #tpu.memory_space<any>>
    %c0_i32_26 = arith.constant 0 : i32
    %c0_i32_27 = arith.constant 0 : i32
    %49 = tpu.memref_slice %arg9[%c0_i32_26, %c0_i32_27] : memref<8x128xf32, #tpu.memory_space<vmem>> -> memref<1x128xf32, #tpu.memory_space<vmem>>
    %50 = tpu.memref_slice %arg10[%c0_i32_24] : memref<8x!tpu.dma_semaphore, #tpu.memory_space<semaphore_mem>> -> memref<1x!tpu.dma_semaphore, #tpu.memory_space<semaphore_mem>>
    %51 = tpu.memref_squeeze %50 : memref<1x!tpu.dma_semaphore, #tpu.memory_space<semaphore_mem>> -> memref<!tpu.dma_semaphore, #tpu.memory_space<semaphore_mem>>
    tpu.wait_dma2 semaphore(%51 : memref<!tpu.dma_semaphore, #tpu.memory_space<semaphore_mem>>) src(%48 : memref<1x128xf32, #tpu.memory_space<any>>) dst(%49 : memref<1x128xf32, #tpu.memory_space<vmem>>)
    %c1_i32_28 = arith.constant 1 : i32
    %c0_i32_29 = arith.constant 0 : i32
    %52 = tpu.memref_slice %arg2[%7, %c0_i32_29] : memref<512x128xf32, #tpu.memory_space<any>> -> memref<1x128xf32, #tpu.memory_space<any>>
    %c1_i32_30 = arith.constant 1 : i32
    %c0_i32_31 = arith.constant 0 : i32
    %53 = tpu.memref_slice %arg9[%c1_i32_30, %c0_i32_31] : memref<8x128xf32, #tpu.memory_space<vmem>> -> memref<1x128xf32, #tpu.memory_space<vmem>>
    %54 = tpu.memref_slice %arg10[%c1_i32_28] : memref<8x!tpu.dma_semaphore, #tpu.memory_space<semaphore_mem>> -> memref<1x!tpu.dma_semaphore, #tpu.memory_space<semaphore_mem>>
    %55 = tpu.memref_squeeze %54 : memref<1x!tpu.dma_semaphore, #tpu.memory_space<semaphore_mem>> -> memref<!tpu.dma_semaphore, #tpu.memory_space<semaphore_mem>>
    tpu.wait_dma2 semaphore(%55 : memref<!tpu.dma_semaphore, #tpu.memory_space<semaphore_mem>>) src(%52 : memref<1x128xf32, #tpu.memory_space<any>>) dst(%53 : memref<1x128xf32, #tpu.memory_space<vmem>>)
    %c2_i32_32 = arith.constant 2 : i32
    %c0_i32_33 = arith.constant 0 : i32
    %56 = tpu.memref_slice %arg2[%13, %c0_i32_33] : memref<512x128xf32, #tpu.memory_space<any>> -> memref<1x128xf32, #tpu.memory_space<any>>
    %c2_i32_34 = arith.constant 2 : i32
    %c0_i32_35 = arith.constant 0 : i32
    %57 = tpu.memref_slice %arg9[%c2_i32_34, %c0_i32_35] : memref<8x128xf32, #tpu.memory_space<vmem>> -> memref<1x128xf32, #tpu.memory_space<vmem>>
    %58 = tpu.memref_slice %arg10[%c2_i32_32] : memref<8x!tpu.dma_semaphore, #tpu.memory_space<semaphore_mem>> -> memref<1x!tpu.dma_semaphore, #tpu.memory_space<semaphore_mem>>
    %59 = tpu.memref_squeeze %58 : memref<1x!tpu.dma_semaphore, #tpu.memory_space<semaphore_mem>> -> memref<!tpu.dma_semaphore, #tpu.memory_space<semaphore_mem>>
    tpu.wait_dma2 semaphore(%59 : memref<!tpu.dma_semaphore, #tpu.memory_space<semaphore_mem>>) src(%56 : memref<1x128xf32, #tpu.memory_space<any>>) dst(%57 : memref<1x128xf32, #tpu.memory_space<vmem>>)
    %c3_i32_36 = arith.constant 3 : i32
    %c0_i32_37 = arith.constant 0 : i32
    %60 = tpu.memref_slice %arg2[%19, %c0_i32_37] : memref<512x128xf32, #tpu.memory_space<any>> -> memref<1x128xf32, #tpu.memory_space<any>>
    %c3_i32_38 = arith.constant 3 : i32
    %c0_i32_39 = arith.constant 0 : i32
    %61 = tpu.memref_slice %arg9[%c3_i32_38, %c0_i32_39] : memref<8x128xf32, #tpu.memory_space<vmem>> -> memref<1x128xf32, #tpu.memory_space<vmem>>
    %62 = tpu.memref_slice %arg10[%c3_i32_36] : memref<8x!tpu.dma_semaphore, #tpu.memory_space<semaphore_mem>> -> memref<1x!tpu.dma_semaphore, #tpu.memory_space<semaphore_mem>>
    %63 = tpu.memref_squeeze %62 : memref<1x!tpu.dma_semaphore, #tpu.memory_space<semaphore_mem>> -> memref<!tpu.dma_semaphore, #tpu.memory_space<semaphore_mem>>
    tpu.wait_dma2 semaphore(%63 : memref<!tpu.dma_semaphore, #tpu.memory_space<semaphore_mem>>) src(%60 : memref<1x128xf32, #tpu.memory_space<any>>) dst(%61 : memref<1x128xf32, #tpu.memory_space<vmem>>)
    %c4_i32_40 = arith.constant 4 : i32
    %c0_i32_41 = arith.constant 0 : i32
    %64 = tpu.memref_slice %arg2[%25, %c0_i32_41] : memref<512x128xf32, #tpu.memory_space<any>> -> memref<1x128xf32, #tpu.memory_space<any>>
    %c4_i32_42 = arith.constant 4 : i32
    %c0_i32_43 = arith.constant 0 : i32
    %65 = tpu.memref_slice %arg9[%c4_i32_42, %c0_i32_43] : memref<8x128xf32, #tpu.memory_space<vmem>> -> memref<1x128xf32, #tpu.memory_space<vmem>>
    %66 = tpu.memref_slice %arg10[%c4_i32_40] : memref<8x!tpu.dma_semaphore, #tpu.memory_space<semaphore_mem>> -> memref<1x!tpu.dma_semaphore, #tpu.memory_space<semaphore_mem>>
    %67 = tpu.memref_squeeze %66 : memref<1x!tpu.dma_semaphore, #tpu.memory_space<semaphore_mem>> -> memref<!tpu.dma_semaphore, #tpu.memory_space<semaphore_mem>>
    tpu.wait_dma2 semaphore(%67 : memref<!tpu.dma_semaphore, #tpu.memory_space<semaphore_mem>>) src(%64 : memref<1x128xf32, #tpu.memory_space<any>>) dst(%65 : memref<1x128xf32, #tpu.memory_space<vmem>>)
    %c5_i32_44 = arith.constant 5 : i32
    %c0_i32_45 = arith.constant 0 : i32
    %68 = tpu.memref_slice %arg2[%31, %c0_i32_45] : memref<512x128xf32, #tpu.memory_space<any>> -> memref<1x128xf32, #tpu.memory_space<any>>
    %c5_i32_46 = arith.constant 5 : i32
    %c0_i32_47 = arith.constant 0 : i32
    %69 = tpu.memref_slice %arg9[%c5_i32_46, %c0_i32_47] : memref<8x128xf32, #tpu.memory_space<vmem>> -> memref<1x128xf32, #tpu.memory_space<vmem>>
    %70 = tpu.memref_slice %arg10[%c5_i32_44] : memref<8x!tpu.dma_semaphore, #tpu.memory_space<semaphore_mem>> -> memref<1x!tpu.dma_semaphore, #tpu.memory_space<semaphore_mem>>
    %71 = tpu.memref_squeeze %70 : memref<1x!tpu.dma_semaphore, #tpu.memory_space<semaphore_mem>> -> memref<!tpu.dma_semaphore, #tpu.memory_space<semaphore_mem>>
    tpu.wait_dma2 semaphore(%71 : memref<!tpu.dma_semaphore, #tpu.memory_space<semaphore_mem>>) src(%68 : memref<1x128xf32, #tpu.memory_space<any>>) dst(%69 : memref<1x128xf32, #tpu.memory_space<vmem>>)
    %c6_i32_48 = arith.constant 6 : i32
    %c0_i32_49 = arith.constant 0 : i32
    %72 = tpu.memref_slice %arg2[%37, %c0_i32_49] : memref<512x128xf32, #tpu.memory_space<any>> -> memref<1x128xf32, #tpu.memory_space<any>>
    %c6_i32_50 = arith.constant 6 : i32
    %c0_i32_51 = arith.constant 0 : i32
    %73 = tpu.memref_slice %arg9[%c6_i32_50, %c0_i32_51] : memref<8x128xf32, #tpu.memory_space<vmem>> -> memref<1x128xf32, #tpu.memory_space<vmem>>
    %74 = tpu.memref_slice %arg10[%c6_i32_48] : memref<8x!tpu.dma_semaphore, #tpu.memory_space<semaphore_mem>> -> memref<1x!tpu.dma_semaphore, #tpu.memory_space<semaphore_mem>>
    %75 = tpu.memref_squeeze %74 : memref<1x!tpu.dma_semaphore, #tpu.memory_space<semaphore_mem>> -> memref<!tpu.dma_semaphore, #tpu.memory_space<semaphore_mem>>
    tpu.wait_dma2 semaphore(%75 : memref<!tpu.dma_semaphore, #tpu.memory_space<semaphore_mem>>) src(%72 : memref<1x128xf32, #tpu.memory_space<any>>) dst(%73 : memref<1x128xf32, #tpu.memory_space<vmem>>)
    %c7_i32_52 = arith.constant 7 : i32
    %c0_i32_53 = arith.constant 0 : i32
    %76 = tpu.memref_slice %arg2[%43, %c0_i32_53] : memref<512x128xf32, #tpu.memory_space<any>> -> memref<1x128xf32, #tpu.memory_space<any>>
    %c7_i32_54 = arith.constant 7 : i32
    %c0_i32_55 = arith.constant 0 : i32
    %77 = tpu.memref_slice %arg9[%c7_i32_54, %c0_i32_55] : memref<8x128xf32, #tpu.memory_space<vmem>> -> memref<1x128xf32, #tpu.memory_space<vmem>>
    %78 = tpu.memref_slice %arg10[%c7_i32_52] : memref<8x!tpu.dma_semaphore, #tpu.memory_space<semaphore_mem>> -> memref<1x!tpu.dma_semaphore, #tpu.memory_space<semaphore_mem>>
    %79 = tpu.memref_squeeze %78 : memref<1x!tpu.dma_semaphore, #tpu.memory_space<semaphore_mem>> -> memref<!tpu.dma_semaphore, #tpu.memory_space<semaphore_mem>>
    tpu.wait_dma2 semaphore(%79 : memref<!tpu.dma_semaphore, #tpu.memory_space<semaphore_mem>>) src(%76 : memref<1x128xf32, #tpu.memory_space<any>>) dst(%77 : memref<1x128xf32, #tpu.memory_space<vmem>>)
    %c0_56 = arith.constant 0 : index
    %c0_57 = arith.constant 0 : index
    %80 = vector.load %arg9[%c0_56, %c0_57] : memref<8x128xf32, #tpu.memory_space<vmem>>, vector<8x128xf32>
    %c0_58 = arith.constant 0 : index
    %c0_59 = arith.constant 0 : index
    %81 = vector.load %arg3[%c0_58, %c0_59] : memref<8x128xf32, #tpu.memory_space<vmem>>, vector<8x128xf32>
    %82 = arith.addf %80, %81 : vector<8x128xf32>
    %c0_60 = arith.constant 0 : index
    %c0_61 = arith.constant 0 : index
    %83 = vector.load %arg6[%c0_60, %c0_61] : memref<11x128xf32, #tpu.memory_space<vmem>>, vector<1x128xf32>
    %c1_62 = arith.constant 1 : index
    %c0_63 = arith.constant 0 : index
    %84 = vector.load %arg6[%c1_62, %c0_63] : memref<11x128xf32, #tpu.memory_space<vmem>>, vector<1x128xf32>
    %cst = arith.constant dense<0.000000e+00> : vector<8xf32>
    %85 = vector.multi_reduction <add>, %82, %cst [1] : vector<8x128xf32> to vector<8xf32>
    %86 = vector.shape_cast %85 : vector<8xf32> to vector<8x1xf32>
    %cst_64 = arith.constant 1.280000e+02 : f32
    %87 = vector.broadcast %cst_64 : f32 to vector<8x1xf32>
    %88 = arith.divf %86, %87 : vector<8x1xf32>
    %89 = vector.broadcast %88 : vector<8x1xf32> to vector<8x128xf32>
    %90 = arith.subf %82, %89 : vector<8x128xf32>
    %91 = arith.mulf %90, %90 : vector<8x128xf32>
    %cst_65 = arith.constant dense<0.000000e+00> : vector<8xf32>
    %92 = vector.multi_reduction <add>, %91, %cst_65 [1] : vector<8x128xf32> to vector<8xf32>
    %93 = vector.shape_cast %92 : vector<8xf32> to vector<8x1xf32>
    %cst_66 = arith.constant 1.280000e+02 : f32
    %94 = vector.broadcast %cst_66 : f32 to vector<8x1xf32>
    %95 = arith.divf %93, %94 : vector<8x1xf32>
    %cst_67 = arith.constant 9.99999996E-13 : f32
    %96 = vector.broadcast %cst_67 : f32 to vector<8x1xf32>
    %97 = arith.addf %95, %96 : vector<8x1xf32>
    %98 = math.rsqrt %97 : vector<8x1xf32>
    %99 = vector.broadcast %98 : vector<8x1xf32> to vector<8x128xf32>
    %100 = arith.mulf %90, %99 : vector<8x128xf32>
    %101 = vector.broadcast %83 : vector<1x128xf32> to vector<8x128xf32>
    %102 = arith.mulf %100, %101 : vector<8x128xf32>
    %103 = vector.broadcast %84 : vector<1x128xf32> to vector<8x128xf32>
    %104 = arith.addf %102, %103 : vector<8x128xf32>
    %105 = arith.truncf %104 : vector<8x128xf32> to vector<8x128xbf16>
    %c0_68 = arith.constant 0 : index
    %c0_69 = arith.constant 0 : index
    %c0_70 = arith.constant 0 : index
    %106 = vector.load %arg4[%c0_68, %c0_69, %c0_70] : memref<4x128x128xbf16, #tpu.memory_space<vmem>>, vector<1x128x128xbf16>
    %107 = vector.shape_cast %106 : vector<1x128x128xbf16> to vector<128x128xbf16>
    %cst_71 = arith.constant dense<0.000000e+00> : vector<8x128xf32>
    %108 = tpu.matmul %105, %107, %cst_71 {dimension_numbers = #tpu.dot_dimension_numbers<[1], [0], [0], [1], [0, 0, 1, 1], [], []>} : vector<8x128xbf16>, vector<128x128xbf16>, vector<8x128xf32> -> vector<8x128xf32>
    %c2_72 = arith.constant 2 : index
    %c0_73 = arith.constant 0 : index
    %109 = vector.load %arg6[%c2_72, %c0_73] : memref<11x128xf32, #tpu.memory_space<vmem>>, vector<1x128xf32>
    %110 = vector.broadcast %109 : vector<1x128xf32> to vector<8x128xf32>
    %111 = arith.addf %108, %110 : vector<8x128xf32>
    %c1_74 = arith.constant 1 : index
    %c0_75 = arith.constant 0 : index
    %c0_76 = arith.constant 0 : index
    %112 = vector.load %arg4[%c1_74, %c0_75, %c0_76] : memref<4x128x128xbf16, #tpu.memory_space<vmem>>, vector<1x128x128xbf16>
    %113 = vector.shape_cast %112 : vector<1x128x128xbf16> to vector<128x128xbf16>
    %cst_77 = arith.constant dense<0.000000e+00> : vector<8x128xf32>
    %114 = tpu.matmul %105, %113, %cst_77 {dimension_numbers = #tpu.dot_dimension_numbers<[1], [0], [0], [1], [0, 0, 1, 1], [], []>} : vector<8x128xbf16>, vector<128x128xbf16>, vector<8x128xf32> -> vector<8x128xf32>
    %c3_78 = arith.constant 3 : index
    %c0_79 = arith.constant 0 : index
    %115 = vector.load %arg6[%c3_78, %c0_79] : memref<11x128xf32, #tpu.memory_space<vmem>>, vector<1x128xf32>
    %116 = vector.broadcast %115 : vector<1x128xf32> to vector<8x128xf32>
    %117 = arith.addf %114, %116 : vector<8x128xf32>
    %c2_80 = arith.constant 2 : index
    %c0_81 = arith.constant 0 : index
    %c0_82 = arith.constant 0 : index
    %118 = vector.load %arg4[%c2_80, %c0_81, %c0_82] : memref<4x128x128xbf16, #tpu.memory_space<vmem>>, vector<1x128x128xbf16>
    %119 = vector.shape_cast %118 : vector<1x128x128xbf16> to vector<128x128xbf16>
    %cst_83 = arith.constant dense<0.000000e+00> : vector<8x128xf32>
    %120 = tpu.matmul %105, %119, %cst_83 {dimension_numbers = #tpu.dot_dimension_numbers<[1], [0], [0], [1], [0, 0, 1, 1], [], []>} : vector<8x128xbf16>, vector<128x128xbf16>, vector<8x128xf32> -> vector<8x128xf32>
    %c4_84 = arith.constant 4 : index
    %c0_85 = arith.constant 0 : index
    %121 = vector.load %arg6[%c4_84, %c0_85] : memref<11x128xf32, #tpu.memory_space<vmem>>, vector<1x128xf32>
    %122 = vector.broadcast %121 : vector<1x128xf32> to vector<8x128xf32>
    %123 = arith.addf %120, %122 : vector<8x128xf32>
    %124 = arith.truncf %111 : vector<8x128xf32> to vector<8x128xbf16>
    %125 = arith.truncf %117 : vector<8x128xf32> to vector<8x128xbf16>
    %cst_86 = arith.constant dense<0.000000e+00> : vector<8x8xf32>
    %126 = tpu.matmul %124, %125, %cst_86 {dimension_numbers = #tpu.dot_dimension_numbers<[1], [1], [0], [0], [0, 0, 1, 0], [], []>} : vector<8x128xbf16>, vector<8x128xbf16>, vector<8x8xf32> -> vector<8x8xf32>
    %cst_87 = arith.constant 0.0883883461 : f32
    %127 = vector.broadcast %cst_87 : f32 to vector<8x8xf32>
    %128 = arith.mulf %126, %127 : vector<8x8xf32>
    %cst_88 = arith.constant dense<0xFF800000> : vector<8xf32>
    %129 = vector.multi_reduction <maximumf>, %128, %cst_88 [1] : vector<8x8xf32> to vector<8xf32>
    %130 = vector.shape_cast %129 : vector<8xf32> to vector<8x1xf32>
    %131 = vector.broadcast %130 : vector<8x1xf32> to vector<8x8xf32>
    %132 = arith.subf %128, %131 : vector<8x8xf32>
    %133 = math.exp %132 : vector<8x8xf32>
    %cst_89 = arith.constant dense<0.000000e+00> : vector<8xf32>
    %134 = vector.multi_reduction <add>, %133, %cst_89 [1] : vector<8x8xf32> to vector<8xf32>
    %135 = vector.shape_cast %134 : vector<8xf32> to vector<8x1xf32>
    %136 = vector.broadcast %135 : vector<8x1xf32> to vector<8x8xf32>
    %137 = arith.divf %133, %136 : vector<8x8xf32>
    %138 = arith.truncf %137 : vector<8x8xf32> to vector<8x8xbf16>
    %139 = arith.truncf %123 : vector<8x128xf32> to vector<8x128xbf16>
    %cst_90 = arith.constant dense<0.000000e+00> : vector<8x128xf32>
    %140 = tpu.matmul %138, %139, %cst_90 {dimension_numbers = #tpu.dot_dimension_numbers<[1], [0], [0], [1], [0, 0, 1, 1], [], []>} : vector<8x8xbf16>, vector<8x128xbf16>, vector<8x128xf32> -> vector<8x128xf32>
    %141 = arith.truncf %140 : vector<8x128xf32> to vector<8x128xbf16>
    %c3_91 = arith.constant 3 : index
    %c0_92 = arith.constant 0 : index
    %c0_93 = arith.constant 0 : index
    %142 = vector.load %arg4[%c3_91, %c0_92, %c0_93] : memref<4x128x128xbf16, #tpu.memory_space<vmem>>, vector<1x128x128xbf16>
    %143 = vector.shape_cast %142 : vector<1x128x128xbf16> to vector<128x128xbf16>
    %cst_94 = arith.constant dense<0.000000e+00> : vector<8x128xf32>
    %144 = tpu.matmul %141, %143, %cst_94 {dimension_numbers = #tpu.dot_dimension_numbers<[1], [0], [0], [1], [0, 0, 1, 1], [], []>} : vector<8x128xbf16>, vector<128x128xbf16>, vector<8x128xf32> -> vector<8x128xf32>
    %c5_95 = arith.constant 5 : index
    %c0_96 = arith.constant 0 : index
    %145 = vector.load %arg6[%c5_95, %c0_96] : memref<11x128xf32, #tpu.memory_space<vmem>>, vector<1x128xf32>
    %146 = vector.broadcast %145 : vector<1x128xf32> to vector<8x128xf32>
    %147 = arith.addf %144, %146 : vector<8x128xf32>
    %148 = arith.addf %104, %147 : vector<8x128xf32>
    %c6_97 = arith.constant 6 : index
    %c0_98 = arith.constant 0 : index
    %149 = vector.load %arg6[%c6_97, %c0_98] : memref<11x128xf32, #tpu.memory_space<vmem>>, vector<1x128xf32>
    %c7_99 = arith.constant 7 : index
    %c0_100 = arith.constant 0 : index
    %150 = vector.load %arg6[%c7_99, %c0_100] : memref<11x128xf32, #tpu.memory_space<vmem>>, vector<1x128xf32>
    %cst_101 = arith.constant dense<0.000000e+00> : vector<8xf32>
    %151 = vector.multi_reduction <add>, %148, %cst_101 [1] : vector<8x128xf32> to vector<8xf32>
    %152 = vector.shape_cast %151 : vector<8xf32> to vector<8x1xf32>
    %cst_102 = arith.constant 1.280000e+02 : f32
    %153 = vector.broadcast %cst_102 : f32 to vector<8x1xf32>
    %154 = arith.divf %152, %153 : vector<8x1xf32>
    %155 = vector.broadcast %154 : vector<8x1xf32> to vector<8x128xf32>
    %156 = arith.subf %148, %155 : vector<8x128xf32>
    %157 = arith.mulf %156, %156 : vector<8x128xf32>
    %cst_103 = arith.constant dense<0.000000e+00> : vector<8xf32>
    %158 = vector.multi_reduction <add>, %157, %cst_103 [1] : vector<8x128xf32> to vector<8xf32>
    %159 = vector.shape_cast %158 : vector<8xf32> to vector<8x1xf32>
    %cst_104 = arith.constant 1.280000e+02 : f32
    %160 = vector.broadcast %cst_104 : f32 to vector<8x1xf32>
    %161 = arith.divf %159, %160 : vector<8x1xf32>
    %cst_105 = arith.constant 9.99999996E-13 : f32
    %162 = vector.broadcast %cst_105 : f32 to vector<8x1xf32>
    %163 = arith.addf %161, %162 : vector<8x1xf32>
    %164 = math.rsqrt %163 : vector<8x1xf32>
    %165 = vector.broadcast %164 : vector<8x1xf32> to vector<8x128xf32>
    %166 = arith.mulf %156, %165 : vector<8x128xf32>
    %167 = vector.broadcast %149 : vector<1x128xf32> to vector<8x128xf32>
    %168 = arith.mulf %166, %167 : vector<8x128xf32>
    %169 = vector.broadcast %150 : vector<1x128xf32> to vector<8x128xf32>
    %170 = arith.addf %168, %169 : vector<8x128xf32>
    %171 = arith.truncf %170 : vector<8x128xf32> to vector<8x128xbf16>
    %c0_106 = arith.constant 0 : index
    %c0_107 = arith.constant 0 : index
    %c0_108 = arith.constant 0 : index
    %172 = vector.load %arg5[%c0_106, %c0_107, %c0_108] : memref<2x128x512xbf16, #tpu.memory_space<vmem>>, vector<1x128x512xbf16>
    %173 = vector.shape_cast %172 : vector<1x128x512xbf16> to vector<128x512xbf16>
    %cst_109 = arith.constant dense<0.000000e+00> : vector<8x512xf32>
    %174 = tpu.matmul %171, %173, %cst_109 {dimension_numbers = #tpu.dot_dimension_numbers<[1], [0], [0], [1], [0, 0, 1, 1], [], []>} : vector<8x128xbf16>, vector<128x512xbf16>, vector<8x512xf32> -> vector<8x512xf32>
    %c0_110 = arith.constant 0 : index
    %c0_111 = arith.constant 0 : index
    %175 = vector.load %arg7[%c0_110, %c0_111] : memref<1x512xf32, #tpu.memory_space<vmem>>, vector<1x512xf32>
    %176 = vector.broadcast %175 : vector<1x512xf32> to vector<8x512xf32>
    %177 = arith.addf %174, %176 : vector<8x512xf32>
    %178 = arith.mulf %177, %177 : vector<8x512xf32>
    %179 = arith.mulf %177, %178 : vector<8x512xf32>
    %cst_112 = arith.constant 4.471500e-02 : f32
    %180 = vector.broadcast %cst_112 : f32 to vector<8x512xf32>
    %181 = arith.mulf %180, %179 : vector<8x512xf32>
    %182 = arith.addf %177, %181 : vector<8x512xf32>
    %cst_113 = arith.constant 0.797884583 : f32
    %183 = vector.broadcast %cst_113 : f32 to vector<8x512xf32>
    %184 = arith.mulf %183, %182 : vector<8x512xf32>
    %185 = math.tanh %184 : vector<8x512xf32>
    %cst_114 = arith.constant 1.000000e+00 : f32
    %186 = vector.broadcast %cst_114 : f32 to vector<8x512xf32>
    %187 = arith.addf %186, %185 : vector<8x512xf32>
    %cst_115 = arith.constant 5.000000e-01 : f32
    %188 = vector.broadcast %cst_115 : f32 to vector<8x512xf32>
    %189 = arith.mulf %188, %187 : vector<8x512xf32>
    %190 = arith.mulf %177, %189 : vector<8x512xf32>
    %191 = arith.truncf %190 : vector<8x512xf32> to vector<8x512xbf16>
    %c1_116 = arith.constant 1 : index
    %c0_117 = arith.constant 0 : index
    %c0_118 = arith.constant 0 : index
    %192 = vector.load %arg5[%c1_116, %c0_117, %c0_118] : memref<2x128x512xbf16, #tpu.memory_space<vmem>>, vector<1x128x512xbf16>
    %193 = vector.shape_cast %192 : vector<1x128x512xbf16> to vector<128x512xbf16>
    %cst_119 = arith.constant dense<0.000000e+00> : vector<8x128xf32>
    %194 = tpu.matmul %191, %193, %cst_119 {dimension_numbers = #tpu.dot_dimension_numbers<[1], [1], [0], [0], [0, 0, 1, 0], [], []>} : vector<8x512xbf16>, vector<128x512xbf16>, vector<8x128xf32> -> vector<8x128xf32>
    %c8 = arith.constant 8 : index
    %c0_120 = arith.constant 0 : index
    %195 = vector.load %arg6[%c8, %c0_120] : memref<11x128xf32, #tpu.memory_space<vmem>>, vector<1x128xf32>
    %196 = vector.broadcast %195 : vector<1x128xf32> to vector<8x128xf32>
    %197 = arith.addf %194, %196 : vector<8x128xf32>
    %198 = arith.addf %170, %197 : vector<8x128xf32>
    %c9 = arith.constant 9 : index
    %c0_121 = arith.constant 0 : index
    %199 = vector.load %arg6[%c9, %c0_121] : memref<11x128xf32, #tpu.memory_space<vmem>>, vector<1x128xf32>
    %c10 = arith.constant 10 : index
    %c0_122 = arith.constant 0 : index
    %200 = vector.load %arg6[%c10, %c0_122] : memref<11x128xf32, #tpu.memory_space<vmem>>, vector<1x128xf32>
    %cst_123 = arith.constant dense<0.000000e+00> : vector<8xf32>
    %201 = vector.multi_reduction <add>, %198, %cst_123 [1] : vector<8x128xf32> to vector<8xf32>
    %202 = vector.shape_cast %201 : vector<8xf32> to vector<8x1xf32>
    %cst_124 = arith.constant 1.280000e+02 : f32
    %203 = vector.broadcast %cst_124 : f32 to vector<8x1xf32>
    %204 = arith.divf %202, %203 : vector<8x1xf32>
    %205 = vector.broadcast %204 : vector<8x1xf32> to vector<8x128xf32>
    %206 = arith.subf %198, %205 : vector<8x128xf32>
    %207 = arith.mulf %206, %206 : vector<8x128xf32>
    %cst_125 = arith.constant dense<0.000000e+00> : vector<8xf32>
    %208 = vector.multi_reduction <add>, %207, %cst_125 [1] : vector<8x128xf32> to vector<8xf32>
    %209 = vector.shape_cast %208 : vector<8xf32> to vector<8x1xf32>
    %cst_126 = arith.constant 1.280000e+02 : f32
    %210 = vector.broadcast %cst_126 : f32 to vector<8x1xf32>
    %211 = arith.divf %209, %210 : vector<8x1xf32>
    %cst_127 = arith.constant 9.99999996E-13 : f32
    %212 = vector.broadcast %cst_127 : f32 to vector<8x1xf32>
    %213 = arith.addf %211, %212 : vector<8x1xf32>
    %214 = math.rsqrt %213 : vector<8x1xf32>
    %215 = vector.broadcast %214 : vector<8x1xf32> to vector<8x128xf32>
    %216 = arith.mulf %206, %215 : vector<8x128xf32>
    %217 = vector.broadcast %199 : vector<1x128xf32> to vector<8x128xf32>
    %218 = arith.mulf %216, %217 : vector<8x128xf32>
    %219 = vector.broadcast %200 : vector<1x128xf32> to vector<8x128xf32>
    %220 = arith.addf %218, %219 : vector<8x128xf32>
    %cst_128 = arith.constant 11.3137083 : f32
    %221 = vector.broadcast %cst_128 : f32 to vector<8x128xf32>
    %222 = arith.mulf %220, %221 : vector<8x128xf32>
    %c0_129 = arith.constant 0 : index
    %c0_130 = arith.constant 0 : index
    %c0_131 = arith.constant 0 : index
    %223 = vector.load %arg8[%c0_129, %c0_130, %c0_131] : memref<1x8x128xf32, #tpu.memory_space<vmem>>, vector<1x8x128xf32>
    %224 = vector.shape_cast %223 : vector<1x8x128xf32> to vector<8x128xf32>
    %225 = vector.shape_cast %222 : vector<8x128xf32> to vector<1x8x128xf32>
    tpu.vector_store %arg8[%c0_129, %c0_130, %c0_131], %225 {strides = array<i32>} : memref<1x8x128xf32, #tpu.memory_space<vmem>>, vector<1x8x128xf32>,
    return
  }
  func.func @transform_1(%arg0: i32, %arg1: memref<2x8xi32, #tpu.memory_space<smem>>) -> (i32, i32) {
    %c0_i32 = arith.constant 0 : i32
    %c0_i32_0 = arith.constant 0 : i32
    %c0_i32_1 = arith.constant 0 : i32
    return %c0_i32, %c0_i32_0 : i32, i32
  }
  func.func @transform_2(%arg0: i32, %arg1: memref<2x8xi32, #tpu.memory_space<smem>>) -> (i32, i32, i32) {
    %c0_i32 = arith.constant 0 : i32
    %c0_i32_0 = arith.constant 0 : i32
    %c0_i32_1 = arith.constant 0 : i32
    %c0_i32_2 = arith.constant 0 : i32
    return %c0_i32, %c0_i32_0, %c0_i32_1 : i32, i32, i32
  }
  func.func @transform_3(%arg0: i32, %arg1: memref<2x8xi32, #tpu.memory_space<smem>>) -> (i32, i32, i32) {
    %c0_i32 = arith.constant 0 : i32
    %c0_i32_0 = arith.constant 0 : i32
    %c0_i32_1 = arith.constant 0 : i32
    %c0_i32_2 = arith.constant 0 : i32
    return %c0_i32, %c0_i32_0, %c0_i32_1 : i32, i32, i32
  }
  func.func @transform_4(%arg0: i32, %arg1: memref<2x8xi32, #tpu.memory_space<smem>>) -> (i32, i32) {
    %c0_i32 = arith.constant 0 : i32
    %c0_i32_0 = arith.constant 0 : i32
    %c0_i32_1 = arith.constant 0 : i32
    return %c0_i32, %c0_i32_0 : i32, i32
  }
  func.func @transform_5(%arg0: i32, %arg1: memref<2x8xi32, #tpu.memory_space<smem>>) -> (i32, i32) {
    %c0_i32 = arith.constant 0 : i32
    %c0_i32_0 = arith.constant 0 : i32
    %c0_i32_1 = arith.constant 0 : i32
    return %c0_i32, %c0_i32_0 : i32, i32
  }
  func.func @transform_6(%arg0: i32, %arg1: memref<2x8xi32, #tpu.memory_space<smem>>) -> (i32, i32, i32) {
    %c0_i32 = arith.constant 0 : i32
    %c0_i32_0 = arith.constant 0 : i32
    %c0_i32_1 = arith.constant 0 : i32
    return %arg0, %c0_i32, %c0_i32_0 : i32, i32, i32
  }
}

</mosaic_0001>

<llo_original>
// kernel: tpu_custom_call.1
$region0: #{tpu_custom_call.1}
  #allocation0 [shape = 'u32[]', space=smem, size = 0x4, offset = 0x4, fixed_abs, tag = 'smem constant byte address 0x4 - core index']
  #allocation1 [shape = 'u32[144,128]{1,0:T(1,128)}', space=vmem, size = 0x12000, scoped, tag = 'internal scratch']
  #allocation2 [shape = 'f32[8,128]{1,0:T(8,128)}', space=vmem, size = 0x1000, scoped, tag = 'scratch operand']
  #allocation3 [shape = 's32[8]{0}', space=sflag, size = 0x20, scoped, tag = 'scratch operand']
  #allocation4 [shape = 's32[1]{0}', space=sflag, size = 0x4, scoped, tag = 'scoped memory for tpu_custom_call.1']
  #allocation5 [shape = 'u8[1024]{0}', space=smem, size = 0x400, scoped, tag = 'prefetched SMEM operand 0']
  #allocation15 [shape = 's32[]', space=sflag, size = 0x4, offset = 0, fixed_abs, tag = 'sflag constant byte address 0x0 - dummy sync flag']
  #allocation16 [shape = 's32[]', space=sflag, size = 0x4, offset = 0, fixed_abs, tag = 'sflag constant byte address 0x0 - dummy sync flag']
  #allocation17 [shape = 'u32[]', space=smem, size = 0x4, offset = 0x44, fixed_abs, tag = 'smem constant byte address 0x44 - assertion arg 0']
  #allocation18 [shape = 'u32[]', space=smem, size = 0x4, offset = 0x48, fixed_abs, tag = 'smem constant byte address 0x48 - assertion arg 1']
  #allocation19 [shape = 's32[]', space=sflag, size = 0x4, offset = 0, fixed_abs, tag = 'sflag constant byte address 0x0 - dummy sync flag']
  #allocation20 [shape = 's32[]', space=sflag, size = 0x4, offset = 0, fixed_abs, tag = 'sflag constant byte address 0x0 - dummy sync flag']
  #allocation21 [shape = 's32[]', space=sflag, size = 0x4, offset = 0, fixed_abs, tag = 'sflag constant byte address 0x0 - dummy sync flag']
  #allocation22 [shape = 's32[]', space=sflag, size = 0x4, offset = 0, fixed_abs, tag = 'sflag constant byte address 0x0 - dummy sync flag']
  #allocation23 [shape = 's32[]', space=sflag, size = 0x4, offset = 0, fixed_abs, tag = 'sflag constant byte address 0x0 - dummy sync flag']
  #allocation24 [shape = 's32[]', space=sflag, size = 0x4, offset = 0, fixed_abs, tag = 'sflag constant byte address 0x0 - dummy sync flag']
  #allocation25 [shape = 's32[]', space=sflag, size = 0x4, offset = 0, fixed_abs, tag = 'sflag constant byte address 0x0 - dummy sync flag']
  #allocation26 [shape = 's32[]', space=sflag, size = 0x4, offset = 0, fixed_abs, tag = 'sflag constant byte address 0x0 - dummy sync flag']
  #allocation27 [shape = 's32[]', space=sflag, size = 0x4, offset = 0, fixed_abs, tag = 'sflag constant byte address 0x0 - dummy sync flag']
  #allocation28 [shape = 's32[]', space=sflag, size = 0x4, offset = 0, fixed_abs, tag = 'sflag constant byte address 0x0 - dummy sync flag']
  #allocation29 [shape = 's32[]', space=sflag, size = 0x4, offset = 0, fixed_abs, tag = 'sflag constant byte address 0x0 - dummy sync flag']
  #allocation30 [shape = 's32[]', space=sflag, size = 0x4, offset = 0, fixed_abs, tag = 'sflag constant byte address 0x0 - dummy sync flag']
  #allocation31 [shape = 's32[]', space=sflag, size = 0x4, offset = 0, fixed_abs, tag = 'sflag constant byte address 0x0 - dummy sync flag']
  #allocation32 [shape = 's32[]', space=sflag, size = 0x4, offset = 0, fixed_abs, tag = 'sflag constant byte address 0x0 - dummy sync flag']
  %s0 = inlined_call_operand.hbm [shape: s32[2,8], index: 0, kind: input, shape index: {}]
  %s1 = inlined_call_operand.hbm [shape: f32[512,128], index: 1, kind: input, shape index: {}]
  %s2 = inlined_call_operand.hbm [shape: f32[8,128], index: 2, kind: input, shape index: {}]
  %s3 = inlined_call_operand.hbm [shape: bf16[4,128,128], index: 3, kind: input, shape index: {}]
  %s4 = inlined_call_operand.hbm [shape: bf16[2,128,512], index: 4, kind: input, shape index: {}]
  %s5 = inlined_call_operand.hbm [shape: f32[11,128], index: 5, kind: input, shape index: {}]
  %s6 = inlined_call_operand.vmem [shape: f32[1,512], index: 6, kind: input, shape index: {}]
  %s7 = inlined_call_operand.hbm [shape: f32[2,8,128], index: 7, kind: output, shape index: {}]
  %s8 = sld [smem:[#allocation0]]
  $region101: #{tpu_custom_call.1} parent=0
    _
  %s10 = ssub.s32 1, %s8
  %s11 = scalar_select 0, %s10, %s8
  %13 = dma.hbm_to_smem %s0, 32, [#allocation5], [#allocation4]
  %14 = dma.done [#allocation4], 32
  %15 = sfence
  $region1: #{tpu_custom_call.1} parent=0
    #allocation6 [shape = 'u8[4096]{0}', space=vmem, size = 0x1000, scoped, tag = 'input window, operand 2, single buffered']
    #allocation7 [shape = 's32[2]{0}', space=sflag, size = 0x8, scoped, tag = 'scoped memory for tpu_custom_call.1']
    #allocation8 [shape = 's32[2]{0}', space=sflag, size = 0x8, scoped, tag = 'scoped memory for tpu_custom_call.1']
    #allocation9 [shape = 'u8[131072]{0}', space=vmem, size = 0x20000, scoped, tag = 'input window, operand 3, single buffered']
    #allocation10 [shape = 's32[1]{0}', space=sflag, size = 0x4, scoped, tag = 'scoped memory for tpu_custom_call.1']
    #allocation11 [shape = 'u8[262144]{0}', space=vmem, size = 0x40000, scoped, tag = 'input window, operand 4, single buffered']
    #allocation12 [shape = 'u8[8192]{0}', space=vmem, size = 0x2000, scoped, tag = 'input window, operand 5, single buffered']
    #allocation13 [shape = 's32[1]{0}', space=sflag, size = 0x4, scoped, tag = 'scoped memory for tpu_custom_call.1']
    #allocation14 [shape = 'u8[8192]{0}', space=vmem, size = 0x2000, scoped, tag = 'output window, operand 0']
    %16 = vsyncpa [#allocation7], 0
    %17 = vsyncpa [#allocation10], 0
    %18 = vsyncpa [#allocation13], 0
    %19 = vsyncpa [#allocation8], 0
    %s20 = scalar_lea.sflag [#allocation8], 1
    %21 = vsyncpa %s20, 0
    loop: start=0, step=1, limit=4
    $region2: #{tpu_custom_call.1} parent=1 // loop_pre_header
      _
    $region3: #{tpu_custom_call.1} parent=1 // loop_header
      %s23 = sphi 0, %s27
      %p24 = scmp.ge.s32.totalorder %s23, 4
      %s31 = sphi 0, %s31
      %s33 = sphi 0, %s31
      %s34 = sphi 0, %s33
      %s48 = sphi 0, %s34
      %s52 = sphi 0, %s52
      %s54 = sphi 0, %s52
      %s55 = sphi 0, %s54
      %s69 = sphi 0, %s55
      %s73 = sphi 0, %s73
      %s75 = sphi 0, %s73
      %s76 = sphi 0, %s75
      %s90 = sphi 0, %s76
      %s94 = sphi 0, %s94
      %s96 = sphi 0, %s94
      %s97 = sphi 0, %s96
      %s111 = sphi 0, %s97
      %s115 = sphi 0, %s115
      %s117 = sphi 0, %s115
      %s118 = sphi 0, %s117
      %s132 = sphi 0, %s118
      %s138 = sphi 0, %s140
      %s141 = sphi 0, %s138
      %s142 = sphi 0, %s141
      %s158 = sphi 0, %s142
    $region4: #{tpu_custom_call.1} parent=1 // loop_header_branch
      %26 = sbr.rel (%p24) target = $region8
    $region5: #{tpu_custom_call.1} parent=1 // loop_body
      %s28 = ssub.s32 %s23, 1
      %s29 = ssub.s32 %s23, 2
      %s30 = sadd.s32 %s23, 1
      %s32 = sadd.s32 %s31, 1
      %p35 = scmp.eq.s32.totalorder %s23, 1
      %p36 = scmp.ne.s32.totalorder %s31, %s33
      %p37 = scmp.eq.s32.totalorder %s23, 0
      %p38 = por %p36, %p37
      %p39 = scmp.ne.s32.totalorder %s31, %s33
      %p40 = scmp.eq.s32.totalorder %s28, 1
      %p41 = por %p39, %p40
      %p42 = scmp.ne.s32.totalorder %s33, %s34
      %p43 = scmp.eq.s32.totalorder %s28, 0
      %p44 = por %p42, %p43
      %p45 = scmp.ne.s32.totalorder %s33, %s34
      %p46 = scmp.eq.s32.totalorder %s29, 1
      %p47 = por %p45, %p46
      %p49 = scmp.ne.s32.totalorder %s34, %s48
      %p50 = scmp.eq.s32.totalorder %s29, 0
      %p51 = por %p49, %p50
      %s53 = sadd.s32 %s52, 1
      %p56 = scmp.eq.s32.totalorder %s23, 1
      %p57 = scmp.ne.s32.totalorder %s52, %s54
      %p58 = scmp.eq.s32.totalorder %s23, 0
      %p59 = por %p57, %p58
      %p60 = scmp.ne.s32.totalorder %s52, %s54
      %p61 = scmp.eq.s32.totalorder %s28, 1
      %p62 = por %p60, %p61
      %p63 = scmp.ne.s32.totalorder %s54, %s55
      %p64 = scmp.eq.s32.totalorder %s28, 0
      %p65 = por %p63, %p64
      %p66 = scmp.ne.s32.totalorder %s54, %s55
      %p67 = scmp.eq.s32.totalorder %s29, 1
      %p68 = por %p66, %p67
      %p70 = scmp.ne.s32.totalorder %s55, %s69
      %p71 = scmp.eq.s32.totalorder %s29, 0
      %p72 = por %p70, %p71
      %s74 = sadd.s32 %s73, 1
      %p77 = scmp.eq.s32.totalorder %s23, 1
      %p78 = scmp.ne.s32.totalorder %s73, %s75
      %p79 = scmp.eq.s32.totalorder %s23, 0
      %p80 = por %p78, %p79
      %p81 = scmp.ne.s32.totalorder %s73, %s75
      %p82 = scmp.eq.s32.totalorder %s28, 1
      %p83 = por %p81, %p82
      %p84 = scmp.ne.s32.totalorder %s75, %s76
      %p85 = scmp.eq.s32.totalorder %s28, 0
      %p86 = por %p84, %p85
      %p87 = scmp.ne.s32.totalorder %s75, %s76
      %p88 = scmp.eq.s32.totalorder %s29, 1
      %p89 = por %p87, %p88
      %p91 = scmp.ne.s32.totalorder %s76, %s90
      %p92 = scmp.eq.s32.totalorder %s29, 0
      %p93 = por %p91, %p92
      %s95 = sadd.s32 %s94, 1
      %p98 = scmp.eq.s32.totalorder %s23, 1
      %p99 = scmp.ne.s32.totalorder %s94, %s96
      %p100 = scmp.eq.s32.totalorder %s23, 0
      %p101 = por %p99, %p100
      %p102 = scmp.ne.s32.totalorder %s94, %s96
      %p103 = scmp.eq.s32.totalorder %s28, 1
      %p104 = por %p102, %p103
      %p105 = scmp.ne.s32.totalorder %s96, %s97
      %p106 = scmp.eq.s32.totalorder %s28, 0
      %p107 = por %p105, %p106
      %p108 = scmp.ne.s32.totalorder %s96, %s97
      %p109 = scmp.eq.s32.totalorder %s29, 1
      %p110 = por %p108, %p109
      %p112 = scmp.ne.s32.totalorder %s97, %s111
      %p113 = scmp.eq.s32.totalorder %s29, 0
      %p114 = por %p112, %p113
      %s116 = sadd.s32 %s115, 1
      %p119 = scmp.eq.s32.totalorder %s23, 1
      %p120 = scmp.ne.s32.totalorder %s115, %s117
      %p121 = scmp.eq.s32.totalorder %s23, 0
      %p122 = por %p120, %p121
      %p123 = scmp.ne.s32.totalorder %s115, %s117
      %p124 = scmp.eq.s32.totalorder %s28, 1
      %p125 = por %p123, %p124
      %p126 = scmp.ne.s32.totalorder %s117, %s118
      %p127 = scmp.eq.s32.totalorder %s28, 0
      %p128 = por %p126, %p127
      %p129 = scmp.ne.s32.totalorder %s117, %s118
      %p130 = scmp.eq.s32.totalorder %s29, 1
      %p131 = por %p129, %p130
      %p133 = scmp.ne.s32.totalorder %s118, %s132
      %p134 = scmp.eq.s32.totalorder %s29, 0
      %p135 = por %p133, %p134
      %s136 = ssub.s32 %s23, %s30
      %p137 = scmp.eq.s32.totalorder %s136, 0
      %s139 = sadd.s32 %s138, 1
      %s140 = scalar_select %p137, %s138, %s139
      %p143 = pneg %p137
      %p144 = scmp.eq.s32.totalorder %s23, 1
      %p145 = por %p143, %p144
      %p146 = scmp.ne.s32.totalorder %s138, %s141
      %p147 = scmp.eq.s32.totalorder %s23, 0
      %p148 = por %p146, %p147
      %p149 = scmp.ne.s32.totalorder %s138, %s141
      %p150 = scmp.eq.s32.totalorder %s28, 1
      %p151 = por %p149, %p150
      %p152 = scmp.ne.s32.totalorder %s141, %s142
      %p153 = scmp.eq.s32.totalorder %s28, 0
      %p154 = por %p152, %p153
      %p155 = scmp.ne.s32.totalorder %s141, %s142
      %p156 = scmp.eq.s32.totalorder %s29, 1
      %p157 = por %p155, %p156
      %p159 = scmp.ne.s32.totalorder %s142, %s158
      %p160 = scmp.eq.s32.totalorder %s29, 0
      %p161 = por %p159, %p160
      %p162 = scmp.le.s32.totalorder 1, %s23
      %p163 = scmp.lt.s32.totalorder %s23, 3
      %p164 = pnand %p162, %p163
      %p165 = pneg %p164
      // Predicated region
      $region9: #{tpu_custom_call.1} parent=5 // pred_check
        _
      $region10: #{tpu_custom_call.1} parent=5 // pred_check_branch
        %167 = sbr.rel (%p164) target = $region12
      $region11: #{tpu_custom_call.1} parent=5 // pred_region
        %s168 = ssub.s32 %s23, 1
        // Predicated region
        $region13: #{tpu_custom_call.1} parent=11 // pred_check
          %p169 = pneg %p44
        $region14: #{tpu_custom_call.1} parent=11 // pred_check_branch
          %171 = sbr.rel (%p169) target = $region16
        $region15: #{tpu_custom_call.1} parent=11 // pred_region
          %s173 = ssub.s32 128, 128
          %174 = vsyncadd [#allocation7], %s173
          %s176 = sshll.u32 [#allocation6], 4
          %s177 = int_to_ptr.vmem [resolvable:$true] %s176
          %179 = dma.hbm_to_vmem [thread:$0]  %s2, 128, %s177, [#allocation7]
        $region16: #{tpu_custom_call.1} parent=11 // pred_fallthru
          _
        // Predicated region
        $region17: #{tpu_custom_call.1} parent=11 // pred_check
          %p180 = pneg %p65
        $region18: #{tpu_custom_call.1} parent=11 // pred_check_branch
          %182 = sbr.rel (%p180) target = $region20
        $region19: #{tpu_custom_call.1} parent=11 // pred_region
          %s184 = ssub.s32 4096, 4096
          %185 = vsyncadd [#allocation10], %s184
          %s186 = sshll.u32 [#allocation9], 4
          %s187 = int_to_ptr.vmem [resolvable:$true] %s186
          %192 = dma.hbm_to_vmem [thread:$0]  %s3, 4096, %s187, [#allocation10], 64, 64, 4
        $region20: #{tpu_custom_call.1} parent=11 // pred_fallthru
          _
        // Predicated region
        $region21: #{tpu_custom_call.1} parent=11 // pred_check
          %p193 = pneg %p86
        $region22: #{tpu_custom_call.1} parent=11 // pred_check_branch
          %195 = sbr.rel (%p193) target = $region24
        $region23: #{tpu_custom_call.1} parent=11 // pred_region
          %s197 = ssub.s32 8192, 8192
          %198 = vsyncadd [#allocation10], %s197
          %s199 = sshll.u32 [#allocation11], 4
          %s200 = int_to_ptr.vmem [resolvable:$true] %s199
          %205 = dma.hbm_to_vmem [thread:$0]  %s4, 8192, %s200, [#allocation10], 256, 256, 16
        $region24: #{tpu_custom_call.1} parent=11 // pred_fallthru
          _
        // Predicated region
        $region25: #{tpu_custom_call.1} parent=11 // pred_check
          %p206 = pneg %p107
        $region26: #{tpu_custom_call.1} parent=11 // pred_check_branch
          %208 = sbr.rel (%p206) target = $region28
        $region27: #{tpu_custom_call.1} parent=11 // pred_region
          %s210 = ssub.s32 256, 256
          %211 = vsyncadd [#allocation13], %s210
          %s212 = sshll.u32 [#allocation12], 4
          %s213 = int_to_ptr.vmem [resolvable:$true] %s212
          %218 = dma.hbm_to_vmem [thread:$0]  %s5, 256, %s213, [#allocation13], 128, 128, 8
        $region28: #{tpu_custom_call.1} parent=11 // pred_fallthru
          _
        // Predicated region
        $region29: #{tpu_custom_call.1} parent=11 // pred_check
          %p219 = pneg %p128
        $region30: #{tpu_custom_call.1} parent=11 // pred_check_branch
          %221 = sbr.rel (%p219) target = $region32
        $region31: #{tpu_custom_call.1} parent=11 // pred_region
          _
        $region32: #{tpu_custom_call.1} parent=11 // pred_fallthru
          _
      $region12: #{tpu_custom_call.1} parent=5 // pred_fallthru
        _
      %p222 = scmp.lt.s32.totalorder %s23, 2
      // Predicated region
      $region33: #{tpu_custom_call.1} parent=5 // pred_check
        %p223 = pneg %p222
      $region34: #{tpu_custom_call.1} parent=5 // pred_check_branch
        %225 = sbr.rel (%p223) target = $region36
      $region35: #{tpu_custom_call.1} parent=5 // pred_region
        _
      $region36: #{tpu_custom_call.1} parent=5 // pred_fallthru
        _
      %p226 = scmp.le.s32.totalorder 1, %s23
      %p227 = scmp.lt.s32.totalorder %s23, 3
      %p228 = pnand %p226, %p227
      %p229 = pneg %p228
      // Predicated region
      $region37: #{tpu_custom_call.1} parent=5 // pred_check
        _
      $region38: #{tpu_custom_call.1} parent=5 // pred_check_branch
        %231 = sbr.rel (%p228) target = $region40
      $region39: #{tpu_custom_call.1} parent=5 // pred_region
        %s232 = ssub.s32 %s23, 1
        // Predicated region
        $region41: #{tpu_custom_call.1} parent=39 // pred_check
          %p233 = pneg %p44
        $region42: #{tpu_custom_call.1} parent=39 // pred_check_branch
          %235 = sbr.rel (%p233) target = $region44
        $region43: #{tpu_custom_call.1} parent=39 // pred_region
          %236 = dma.done [#allocation7], 128
        $region44: #{tpu_custom_call.1} parent=39 // pred_fallthru
          _
        // Predicated region
        $region45: #{tpu_custom_call.1} parent=39 // pred_check
          %p237 = pneg %p65
        $region46: #{tpu_custom_call.1} parent=39 // pred_check_branch
          %239 = sbr.rel (%p237) target = $region48
        $region47: #{tpu_custom_call.1} parent=39 // pred_region
          %240 = dma.done [#allocation10], 4096
        $region48: #{tpu_custom_call.1} parent=39 // pred_fallthru
          _
        // Predicated region
        $region49: #{tpu_custom_call.1} parent=39 // pred_check
          %p241 = pneg %p86
        $region50: #{tpu_custom_call.1} parent=39 // pred_check_branch
          %243 = sbr.rel (%p241) target = $region52
        $region51: #{tpu_custom_call.1} parent=39 // pred_region
          %244 = dma.done [#allocation10], 8192
        $region52: #{tpu_custom_call.1} parent=39 // pred_fallthru
          _
        // Predicated region
        $region53: #{tpu_custom_call.1} parent=39 // pred_check
          %p245 = pneg %p107
        $region54: #{tpu_custom_call.1} parent=39 // pred_check_branch
          %247 = sbr.rel (%p245) target = $region56
        $region55: #{tpu_custom_call.1} parent=39 // pred_region
          %248 = dma.done [#allocation13], 256
        $region56: #{tpu_custom_call.1} parent=39 // pred_fallthru
          _
        %p249 = pneg %p44
        %p250 = pneg %p41
        %p251 = pneg %p65
        %p252 = pneg %p62
        %p253 = pneg %p86
        %p254 = pneg %p83
        %p255 = pneg %p107
        %p256 = pneg %p104
        %p257 = pneg %p128
        %p258 = pneg %p125
        %p259 = pneg %p154
        %p260 = pneg %p151
        %s261 = sand.u32 %s141, 1
        %s262 = scalar_lea.sflag [#allocation8], %s261
        %s263 = sand.u32 %s141, 1
        %s264 = smul.addr %s263, 8
        %s265 = scalar_lea.vmem [#allocation14], %s264
        %s267 = smul.u32 %s28, 128
        %s268 = sld [smem:[#allocation5 + %s267]]
        %s269 = smul.addr %s268, 16
        %s270 = scalar_lea.hbm %s1, %s269
        // Predicated region
        $region57: #{tpu_custom_call.1} parent=39 // pred_check
          _
        $region58: #{tpu_custom_call.1} parent=39 // pred_check_branch
          %272 = sbr.rel target = $region60
        $region59: #{tpu_custom_call.1} parent=39 // pred_region
          %273 = sst [smem:[#allocation17]] [#allocation16]
          %274 = sst [smem:[#allocation18]] [#allocation15]
        $region60: #{tpu_custom_call.1} parent=39 // pred_fallthru
          _
        %276 = shalt.err (0)
        %s278 = sshll.u32 [#allocation2], 4
        %s279 = int_to_ptr.vmem [resolvable:$true] %s278
        %281 = dma.hbm_to_vmem [thread:$0]  %s270, 16, %s279, [#allocation3]
        %s282 = sadd.s32 %s267, 1
        %s283 = sld [smem:[#allocation5 + %s282]]
        %s284 = smul.addr %s283, 16
        %s285 = scalar_lea.hbm %s1, %s284
        %s286 = scalar_lea.vmem [#allocation2], 1
        %s287 = scalar_lea.sflag [#allocation3], 1
        // Predicated region
        $region61: #{tpu_custom_call.1} parent=39 // pred_check
          _
        $region62: #{tpu_custom_call.1} parent=39 // pred_check_branch
          %289 = sbr.rel target = $region64
        $region63: #{tpu_custom_call.1} parent=39 // pred_region
          %290 = sst [smem:[#allocation17]] [#allocation20]
          %291 = sst [smem:[#allocation18]] [#allocation19]
        $region64: #{tpu_custom_call.1} parent=39 // pred_fallthru
          _
        %293 = shalt.err (0)
        %s295 = sshll.u32 %s286, 4
        %s296 = int_to_ptr.vmem [resolvable:$true] %s295
        %298 = dma.hbm_to_vmem [thread:$0]  %s285, 16, %s296, %s287
        %s299 = sadd.s32 %s267, 2
        %s300 = sld [smem:[#allocation5 + %s299]]
        %s301 = smul.addr %s300, 16
        %s302 = scalar_lea.hbm %s1, %s301
        %s303 = scalar_lea.vmem [#allocation2], 2
        %s304 = scalar_lea.sflag [#allocation3], 2
        // Predicated region
        $region65: #{tpu_custom_call.1} parent=39 // pred_check
          _
        $region66: #{tpu_custom_call.1} parent=39 // pred_check_branch
          %306 = sbr.rel target = $region68
        $region67: #{tpu_custom_call.1} parent=39 // pred_region
          %307 = sst [smem:[#allocation17]] [#allocation22]
          %308 = sst [smem:[#allocation18]] [#allocation21]
        $region68: #{tpu_custom_call.1} parent=39 // pred_fallthru
          _
        %310 = shalt.err (0)
        %s312 = sshll.u32 %s303, 4
        %s313 = int_to_ptr.vmem [resolvable:$true] %s312
        %315 = dma.hbm_to_vmem [thread:$0]  %s302, 16, %s313, %s304
        %s316 = sadd.s32 %s267, 3
        %s317 = sld [smem:[#allocation5 + %s316]]
        %s318 = smul.addr %s317, 16
        %s319 = scalar_lea.hbm %s1, %s318
        %s320 = scalar_lea.vmem [#allocation2], 3
        %s321 = scalar_lea.sflag [#allocation3], 3
        // Predicated region
        $region69: #{tpu_custom_call.1} parent=39 // pred_check
          _
        $region70: #{tpu_custom_call.1} parent=39 // pred_check_branch
          %323 = sbr.rel target = $region72
        $region71: #{tpu_custom_call.1} parent=39 // pred_region
          %324 = sst [smem:[#allocation17]] [#allocation24]
          %325 = sst [smem:[#allocation18]] [#allocation23]
        $region72: #{tpu_custom_call.1} parent=39 // pred_fallthru
          _
        %327 = shalt.err (0)
        %s329 = sshll.u32 %s320, 4
        %s330 = int_to_ptr.vmem [resolvable:$true] %s329
        %332 = dma.hbm_to_vmem [thread:$0]  %s319, 16, %s330, %s321
        %s333 = sadd.s32 %s267, 4
        %s334 = sld [smem:[#allocation5 + %s333]]
        %s335 = smul.addr %s334, 16
        %s336 = scalar_lea.hbm %s1, %s335
        %s337 = scalar_lea.vmem [#allocation2], 4
        %s338 = scalar_lea.sflag [#allocation3], 4
        // Predicated region
        $region73: #{tpu_custom_call.1} parent=39 // pred_check
          _
        $region74: #{tpu_custom_call.1} parent=39 // pred_check_branch
          %340 = sbr.rel target = $region76
        $region75: #{tpu_custom_call.1} parent=39 // pred_region
          %341 = sst [smem:[#allocation17]] [#allocation26]
          %342 = sst [smem:[#allocation18]] [#allocation25]
        $region76: #{tpu_custom_call.1} parent=39 // pred_fallthru
          _
        %344 = shalt.err (0)
        %s346 = sshll.u32 %s337, 4
        %s347 = int_to_ptr.vmem [resolvable:$true] %s346
        %349 = dma.hbm_to_vmem [thread:$0]  %s336, 16, %s347, %s338
        %s350 = sadd.s32 %s267, 5
        %s351 = sld [smem:[#allocation5 + %s350]]
        %s352 = smul.addr %s351, 16
        %s353 = scalar_lea.hbm %s1, %s352
        %s354 = scalar_lea.vmem [#allocation2], 5
        %s355 = scalar_lea.sflag [#allocation3], 5
        // Predicated region
        $region77: #{tpu_custom_call.1} parent=39 // pred_check
          _
        $region78: #{tpu_custom_call.1} parent=39 // pred_check_branch
          %357 = sbr.rel target = $region80
        $region79: #{tpu_custom_call.1} parent=39 // pred_region
          %358 = sst [smem:[#allocation17]] [#allocation28]
          %359 = sst [smem:[#allocation18]] [#allocation27]
        $region80: #{tpu_custom_call.1} parent=39 // pred_fallthru
          _
        %361 = shalt.err (0)
        %s363 = sshll.u32 %s354, 4
        %s364 = int_to_ptr.vmem [resolvable:$true] %s363
        %366 = dma.hbm_to_vmem [thread:$0]  %s353, 16, %s364, %s355
        %s367 = sadd.s32 %s267, 6
        %s368 = sld [smem:[#allocation5 + %s367]]
        %s369 = smul.addr %s368, 16
        %s370 = scalar_lea.hbm %s1, %s369
        %s371 = scalar_lea.vmem [#allocation2], 6
        %s372 = scalar_lea.sflag [#allocation3], 6
        // Predicated region
        $region81: #{tpu_custom_call.1} parent=39 // pred_check
          _
        $region82: #{tpu_custom_call.1} parent=39 // pred_check_branch
          %374 = sbr.rel target = $region84
        $region83: #{tpu_custom_call.1} parent=39 // pred_region
          %375 = sst [smem:[#allocation17]] [#allocation30]
          %376 = sst [smem:[#allocation18]] [#allocation29]
        $region84: #{tpu_custom_call.1} parent=39 // pred_fallthru
          _
        %378 = shalt.err (0)
        %s380 = sshll.u32 %s371, 4
        %s381 = int_to_ptr.vmem [resolvable:$true] %s380
        %383 = dma.hbm_to_vmem [thread:$0]  %s370, 16, %s381, %s372
        %s384 = sadd.s32 %s267, 7
        %s385 = sld [smem:[#allocation5 + %s384]]
        %s386 = smul.addr %s385, 16
        %s387 = scalar_lea.hbm %s1, %s386
        %s388 = scalar_lea.vmem [#allocation2], 7
        %s389 = scalar_lea.sflag [#allocation3], 7
        // Predicated region
        $region85: #{tpu_custom_call.1} parent=39 // pred_check
          _
        $region86: #{tpu_custom_call.1} parent=39 // pred_check_branch
          %391 = sbr.rel target = $region88
        $region87: #{tpu_custom_call.1} parent=39 // pred_region
          %392 = sst [smem:[#allocation17]] [#allocation32]
          %393 = sst [smem:[#allocation18]] [#allocation31]
        $region88: #{tpu_custom_call.1} parent=39 // pred_fallthru
          _
        %395 = shalt.err (0)
        %s397 = sshll.u32 %s388, 4
        %s398 = int_to_ptr.vmem [resolvable:$true] %s397
        %400 = dma.hbm_to_vmem [thread:$0]  %s387, 16, %s398, %s389
        %s401 = smul.u32 1, 1
        %s402 = sshll.u32 %s401, 4
        %403 = dma.done [#allocation3], %s402
        %s404 = sshll.u32 %s401, 4
        %405 = dma.done %s287, %s404
        %s406 = sshll.u32 %s401, 4
        %407 = dma.done %s304, %s406
        %s408 = sshll.u32 %s401, 4
        %409 = dma.done %s321, %s408
        %s410 = sshll.u32 %s401, 4
        %411 = dma.done %s338, %s410
        %s412 = sshll.u32 %s401, 4
        %413 = dma.done %s355, %s412
        %s414 = sshll.u32 %s401, 4
        %415 = dma.done %s372, %s414
        %s416 = sshll.u32 %s401, 4
        %417 = dma.done %s389, %s416
        %v418 = vld [vmem:[#allocation2] sm:$0xff]
        %v419 = vld [vmem:[#allocation6] sm:$0xff]
        %v420 = vadd.f32 %v418, %v419
        %v421 = vld [vmem:[#allocation12] sm:$0x1]
        %v422 = vld [vmem:[#allocation12 + $0x1] sm:$0x1]
        %423 = vadd.xlane.f32.xlu0 %v420
        %v424 = vpop.xlane.xlu0 %423
        %v425 = vrcp.pop 128.0
        %v426 = vmul.f32 %v424, %v425
        %v427 = vsub.f32 %v420, %v426
        %v428 = vmul.f32 %v427, %v427
        %429 = vadd.xlane.f32.xlu0 %v428
        %v430 = vpop.xlane.xlu0 %429
        %v431 = vmul.f32 %v430, %v425
        %v432 = vadd.f32 %v431, 1e-12
        %v433 = vrsqrt.pop %v432
        %v434 = vmul.f32 %v427, %v433
        %v435 = vlaneseq
        %v436 = vshrl.u32 %v435, 7
        %v437 = vsub.s32 0, %v436
        %v438 = vrot.slane %v421, %v437
        %v439 = vmul.f32 %v434, %v438
        %v440 = vlaneseq
        %v441 = vshrl.u32 %v440, 7
        %v442 = vsub.s32 0, %v441
        %v443 = vrot.slane %v422, %v442
        %v444 = vadd.f32 %v439, %v443
        %v445 = vpack.c.bf16 %v444, %v444
        %v446 = vld [vmem:[#allocation9] sm:$0xf]
        %v447 = vld [vmem:[#allocation9 + $0x4] sm:$0xf]
        %v448 = vld [vmem:[#allocation9 + $0x8] sm:$0xf]
        %v449 = vld [vmem:[#allocation9 + $0xc] sm:$0xf]
        %v450 = vld [vmem:[#allocation9 + $0x10] sm:$0xf]
        %v451 = vld [vmem:[#allocation9 + $0x14] sm:$0xf]
        %v452 = vld [vmem:[#allocation9 + $0x18] sm:$0xf]
        %v453 = vld [vmem:[#allocation9 + $0x1c] sm:$0xf]
        %v454 = vld [vmem:[#allocation9 + $0x20] sm:$0xf]
        %v455 = vld [vmem:[#allocation9 + $0x24] sm:$0xf]
        %v456 = vld [vmem:[#allocation9 + $0x28] sm:$0xf]
        %v457 = vld [vmem:[#allocation9 + $0x2c] sm:$0xf]
        %v458 = vld [vmem:[#allocation9 + $0x30] sm:$0xf]
        %v459 = vld [vmem:[#allocation9 + $0x34] sm:$0xf]
        %v460 = vld [vmem:[#allocation9 + $0x38] sm:$0xf]
        %v461 = vld [vmem:[#allocation9 + $0x3c] sm:$0xf]
        %v462 = vld [vmem:[#allocation12 + $0x2] sm:$0x1]
        %v463 = vlaneseq
        %v464 = vshrl.u32 %v463, 7
        %v465 = vsub.s32 0, %v464
        %v466 = vrot.slane %v462, %v465
        %v483 = vunpack.c.l.b16 %v446
        %v484 = vunpack.c.l.b16 %v447
        %v485 = vunpack.c.l.b16 %v448
        %v486 = vunpack.c.l.b16 %v449
        %v487 = vunpack.c.l.b16 %v450
        %v488 = vunpack.c.l.b16 %v451
        %v489 = vunpack.c.l.b16 %v452
        %v490 = vunpack.c.l.b16 %v453
        %v491 = vunpack.c.l.b16 %v454
        %v492 = vunpack.c.l.b16 %v455
        %v493 = vunpack.c.l.b16 %v456
        %v494 = vunpack.c.l.b16 %v457
        %v495 = vunpack.c.l.b16 %v458
        %v496 = vunpack.c.l.b16 %v459
        %v497 = vunpack.c.l.b16 %v460
        %v498 = vunpack.c.l.b16 %v461
        %v499 = vpack.c.b16 %v484, %v483
        %v500 = vpack.c.b16 %v486, %v485
        %v501 = vpack.c.b16 %v488, %v487
        %v502 = vpack.c.b16 %v490, %v489
        %v503 = vpack.c.b16 %v492, %v491
        %v504 = vpack.c.b16 %v494, %v493
        %v505 = vpack.c.b16 %v496, %v495
        %v506 = vpack.c.b16 %v498, %v497
        %515 = vmatprep.subr.bf16.mxu0 0
        %516 = vmatpush1.bf16.msra.mxu0 %v506
        %517 = vmatprep.subr.bf16.mxu0 0
        %518 = vmatpush1.bf16.msra.mxu0 %v505
        %519 = vmatprep.subr.bf16.mxu0 0
        %520 = vmatpush1.bf16.msra.mxu0 %v504
        %521 = vmatprep.subr.bf16.mxu0 0
        %522 = vmatpush1.bf16.msra.mxu0 %v503
        %523 = vmatprep.subr.bf16.mxu0 0
        %524 = vmatpush1.bf16.msra.mxu0 %v502
        %525 = vmatprep.subr.bf16.mxu0 0
        %526 = vmatpush1.bf16.msra.mxu0 %v501
        %527 = vmatprep.subr.bf16.mxu0 0
        %528 = vmatpush1.bf16.msra.mxu0 %v500
        %529 = vmatprep.subr.bf16.mxu0 0
        %530 = vmatpush1.bf16.msra.mxu0 %v499
        %531 = vmatprep.subr.bf16.mxu0 0
        %532 = vmatpush2.bf16.msra.mxu0 0
        %533 = vmatprep.subr.bf16.mxu0 0
        %534 = vmatpush2.bf16.msra.mxu0 0
        %535 = vmatprep.subr.bf16.mxu0 0
        %536 = vmatpush2.bf16.msra.mxu0 0
        %537 = vmatprep.subr.bf16.mxu0 0
        %538 = vmatpush2.bf16.msra.mxu0 0
        %539 = vmatprep.subr.bf16.mxu0 0
        %540 = vmatpush2.bf16.msra.mxu0 0
        %541 = vmatprep.subr.bf16.mxu0 0
        %542 = vmatpush2.bf16.msra.mxu0 0
        %543 = vmatprep.subr.bf16.mxu0 0
        %544 = vmatpush2.bf16.msra.mxu0 0
        %545 = vmatprep.subr.bf16.mxu0 0
        %546 = vmatpush2.bf16.msra.mxu0 0
        %547 = vmatprep.mubr.bf16.mxu0 0
        %548 = vmatmul.mubr.bf16.gmra.mxu0 %v445
        %v549 = vpop.f32.mrf.mxu0
        %v550 = vadd.f32 %v466, %v549
        %v551 = vpop.f32.mrf.mxu0
        %v552 = vpop.f32.mrf.mxu0
        %v553 = vpop.f32.mrf.mxu0
        %554 = vdwg.mxu0
        %s555 = scalar_lea.vmem [#allocation9], 64
        %v556 = vld [vmem:[%s555] sm:$0xf]
        %v557 = vld [vmem:[%s555 + $0x4] sm:$0xf]
        %v558 = vld [vmem:[%s555 + $0x8] sm:$0xf]
        %v559 = vld [vmem:[%s555 + $0xc] sm:$0xf]
        %v560 = vld [vmem:[%s555 + $0x10] sm:$0xf]
        %v561 = vld [vmem:[%s555 + $0x14] sm:$0xf]
        %v562 = vld [vmem:[%s555 + $0x18] sm:$0xf]
        %v563 = vld [vmem:[%s555 + $0x1c] sm:$0xf]
        %v564 = vld [vmem:[%s555 + $0x20] sm:$0xf]
        %v565 = vld [vmem:[%s555 + $0x24] sm:$0xf]
        %v566 = vld [vmem:[%s555 + $0x28] sm:$0xf]
        %v567 = vld [vmem:[%s555 + $0x2c] sm:$0xf]
        %v568 = vld [vmem:[%s555 + $0x30] sm:$0xf]
        %v569 = vld [vmem:[%s555 + $0x34] sm:$0xf]
        %v570 = vld [vmem:[%s555 + $0x38] sm:$0xf]
        %v571 = vld [vmem:[%s555 + $0x3c] sm:$0xf]
        %v572 = vld [vmem:[#allocation12 + $0x3] sm:$0x1]
        %v573 = vlaneseq
        %v574 = vshrl.u32 %v573, 7
        %v575 = vsub.s32 0, %v574
        %v576 = vrot.slane %v572, %v575
        %v593 = vunpack.c.l.b16 %v556
        %v594 = vunpack.c.l.b16 %v557
        %v595 = vunpack.c.l.b16 %v558
        %v596 = vunpack.c.l.b16 %v559
        %v597 = vunpack.c.l.b16 %v560
        %v598 = vunpack.c.l.b16 %v561
        %v599 = vunpack.c.l.b16 %v562
        %v600 = vunpack.c.l.b16 %v563
        %v601 = vunpack.c.l.b16 %v564
        %v602 = vunpack.c.l.b16 %v565
        %v603 = vunpack.c.l.b16 %v566
        %v604 = vunpack.c.l.b16 %v567
        %v605 = vunpack.c.l.b16 %v568
        %v606 = vunpack.c.l.b16 %v569
        %v607 = vunpack.c.l.b16 %v570
        %v608 = vunpack.c.l.b16 %v571
        %v609 = vpack.c.b16 %v594, %v593
        %v610 = vpack.c.b16 %v596, %v595
        %v611 = vpack.c.b16 %v598, %v597
        %v612 = vpack.c.b16 %v600, %v599
        %v613 = vpack.c.b16 %v602, %v601
        %v614 = vpack.c.b16 %v604, %v603
        %v615 = vpack.c.b16 %v606, %v605
        %v616 = vpack.c.b16 %v608, %v607
        %625 = vmatprep.subr.bf16.mxu0 0
        %626 = vmatpush1.bf16.msra.mxu0 %v616
        %627 = vmatprep.subr.bf16.mxu0 0
        %628 = vmatpush1.bf16.msra.mxu0 %v615
        %629 = vmatprep.subr.bf16.mxu0 0
        %630 = vmatpush1.bf16.msra.mxu0 %v614
        %631 = vmatprep.subr.bf16.mxu0 0
        %632 = vmatpush1.bf16.msra.mxu0 %v613
        %633 = vmatprep.subr.bf16.mxu0 0
        %634 = vmatpush1.bf16.msra.mxu0 %v612
        %635 = vmatprep.subr.bf16.mxu0 0
        %636 = vmatpush1.bf16.msra.mxu0 %v611
        %637 = vmatprep.subr.bf16.mxu0 0
        %638 = vmatpush1.bf16.msra.mxu0 %v610
        %639 = vmatprep.subr.bf16.mxu0 0
        %640 = vmatpush1.bf16.msra.mxu0 %v609
        %641 = vmatprep.subr.bf16.mxu0 0
        %642 = vmatpush2.bf16.msra.mxu0 0
        %643 = vmatprep.subr.bf16.mxu0 0
        %644 = vmatpush2.bf16.msra.mxu0 0
        %645 = vmatprep.subr.bf16.mxu0 0
        %646 = vmatpush2.bf16.msra.mxu0 0
        %647 = vmatprep.subr.bf16.mxu0 0
        %648 = vmatpush2.bf16.msra.mxu0 0
        %649 = vmatprep.subr.bf16.mxu0 0
        %650 = vmatpush2.bf16.msra.mxu0 0
        %651 = vmatprep.subr.bf16.mxu0 0
        %652 = vmatpush2.bf16.msra.mxu0 0
        %653 = vmatprep.subr.bf16.mxu0 0
        %654 = vmatpush2.bf16.msra.mxu0 0
        %655 = vmatprep.subr.bf16.mxu0 0
        %656 = vmatpush2.bf16.msra.mxu0 0
        %657 = vmatprep.mubr.bf16.mxu0 0
        %658 = vmatmul.mubr.bf16.gmra.mxu0 %v445
        %v659 = vpop.f32.mrf.mxu0
        %v660 = vadd.f32 %v576, %v659
        %v661 = vpop.f32.mrf.mxu0
        %v662 = vpop.f32.mrf.mxu0
        %v663 = vpop.f32.mrf.mxu0
        %664 = vdwg.mxu0
        %s665 = scalar_lea.vmem [#allocation9], 128
        %v666 = vld [vmem:[%s665] sm:$0xf]
        %v667 = vld [vmem:[%s665 + $0x4] sm:$0xf]
        %v668 = vld [vmem:[%s665 + $0x8] sm:$0xf]
        %v669 = vld [vmem:[%s665 + $0xc] sm:$0xf]
        %v670 = vld [vmem:[%s665 + $0x10] sm:$0xf]
        %v671 = vld [vmem:[%s665 + $0x14] sm:$0xf]
        %v672 = vld [vmem:[%s665 + $0x18] sm:$0xf]
        %v673 = vld [vmem:[%s665 + $0x1c] sm:$0xf]
        %v674 = vld [vmem:[%s665 + $0x20] sm:$0xf]
        %v675 = vld [vmem:[%s665 + $0x24] sm:$0xf]
        %v676 = vld [vmem:[%s665 + $0x28] sm:$0xf]
        %v677 = vld [vmem:[%s665 + $0x2c] sm:$0xf]
        %v678 = vld [vmem:[%s665 + $0x30] sm:$0xf]
        %v679 = vld [vmem:[%s665 + $0x34] sm:$0xf]
        %v680 = vld [vmem:[%s665 + $0x38] sm:$0xf]
        %v681 = vld [vmem:[%s665 + $0x3c] sm:$0xf]
        %v682 = vld [vmem:[#allocation12 + $0x4] sm:$0x1]
        %v683 = vlaneseq
        %v684 = vshrl.u32 %v683, 7
        %v685 = vsub.s32 0, %v684
        %v686 = vrot.slane %v682, %v685
        %v703 = vunpack.c.l.b16 %v666
        %v704 = vunpack.c.l.b16 %v667
        %v705 = vunpack.c.l.b16 %v668
        %v706 = vunpack.c.l.b16 %v669
        %v707 = vunpack.c.l.b16 %v670
        %v708 = vunpack.c.l.b16 %v671
        %v709 = vunpack.c.l.b16 %v672
        %v710 = vunpack.c.l.b16 %v673
        %v711 = vunpack.c.l.b16 %v674
        %v712 = vunpack.c.l.b16 %v675
        %v713 = vunpack.c.l.b16 %v676
        %v714 = vunpack.c.l.b16 %v677
        %v715 = vunpack.c.l.b16 %v678
        %v716 = vunpack.c.l.b16 %v679
        %v717 = vunpack.c.l.b16 %v680
        %v718 = vunpack.c.l.b16 %v681
        %v719 = vpack.c.b16 %v704, %v703
        %v720 = vpack.c.b16 %v706, %v705
        %v721 = vpack.c.b16 %v708, %v707
        %v722 = vpack.c.b16 %v710, %v709
        %v723 = vpack.c.b16 %v712, %v711
        %v724 = vpack.c.b16 %v714, %v713
        %v725 = vpack.c.b16 %v716, %v715
        %v726 = vpack.c.b16 %v718, %v717
        %735 = vmatprep.subr.bf16.mxu0 0
        %736 = vmatpush1.bf16.msra.mxu0 %v726
        %737 = vmatprep.subr.bf16.mxu0 0
        %738 = vmatpush1.bf16.msra.mxu0 %v725
        %739 = vmatprep.subr.bf16.mxu0 0
        %740 = vmatpush1.bf16.msra.mxu0 %v724
        %741 = vmatprep.subr.bf16.mxu0 0
        %742 = vmatpush1.bf16.msra.mxu0 %v723
        %743 = vmatprep.subr.bf16.mxu0 0
        %744 = vmatpush1.bf16.msra.mxu0 %v722
        %745 = vmatprep.subr.bf16.mxu0 0
        %746 = vmatpush1.bf16.msra.mxu0 %v721
        %747 = vmatprep.subr.bf16.mxu0 0
        %748 = vmatpush1.bf16.msra.mxu0 %v720
        %749 = vmatprep.subr.bf16.mxu0 0
        %750 = vmatpush1.bf16.msra.mxu0 %v719
        %751 = vmatprep.subr.bf16.mxu0 0
        %752 = vmatpush2.bf16.msra.mxu0 0
        %753 = vmatprep.subr.bf16.mxu0 0
        %754 = vmatpush2.bf16.msra.mxu0 0
        %755 = vmatprep.subr.bf16.mxu0 0
        %756 = vmatpush2.bf16.msra.mxu0 0
        %757 = vmatprep.subr.bf16.mxu0 0
        %758 = vmatpush2.bf16.msra.mxu0 0
        %759 = vmatprep.subr.bf16.mxu0 0
        %760 = vmatpush2.bf16.msra.mxu0 0
        %761 = vmatprep.subr.bf16.mxu0 0
        %762 = vmatpush2.bf16.msra.mxu0 0
        %763 = vmatprep.subr.bf16.mxu0 0
        %764 = vmatpush2.bf16.msra.mxu0 0
        %765 = vmatprep.subr.bf16.mxu0 0
        %766 = vmatpush2.bf16.msra.mxu0 0
        %767 = vmatprep.mubr.bf16.mxu0 0
        %768 = vmatmul.mubr.bf16.gmra.mxu0 %v445
        %v769 = vpop.f32.mrf.mxu0
        %v770 = vadd.f32 %v686, %v769
        %v771 = vpop.f32.mrf.mxu0
        %v772 = vpop.f32.mrf.mxu0
        %v773 = vpop.f32.mrf.mxu0
        %774 = vdwg.mxu0
        %v775 = vpack.c.bf16 %v550, %v550
        %v776 = vpack.c.bf16 %v660, %v660
        %777 = vmatprep.subr.bf16.mxu0 0
        %778 = vmatpush1.bf16.xpose.msra.mxu0 0
        %779 = vmatprep.subr.bf16.mxu0 0
        %780 = vmatpush1.bf16.xpose.msra.mxu0 0
        %781 = vmatprep.subr.bf16.mxu0 0
        %782 = vmatpush1.bf16.xpose.msra.mxu0 0
        %783 = vmatprep.subr.bf16.mxu0 0
        %784 = vmatpush1.bf16.xpose.msra.mxu0 0
        %785 = vmatprep.subr.bf16.mxu0 0
        %786 = vmatpush1.bf16.xpose.msra.mxu0 0
        %787 = vmatprep.subr.bf16.mxu0 0
        %788 = vmatpush1.bf16.xpose.msra.mxu0 0
        %789 = vmatprep.subr.bf16.mxu0 0
        %790 = vmatpush1.bf16.xpose.msra.mxu0 0
        %791 = vmatprep.subr.bf16.mxu0 0
        %792 = vmatpush1.bf16.xpose.msra.mxu0 %v776
        %793 = vmatprep.subr.bf16.mxu0 0
        %794 = vmatpush2.bf16.xpose.msra.mxu0 0
        %795 = vmatprep.subr.bf16.mxu0 0
        %796 = vmatpush2.bf16.xpose.msra.mxu0 0
        %797 = vmatprep.subr.bf16.mxu0 0
        %798 = vmatpush2.bf16.xpose.msra.mxu0 0
        %799 = vmatprep.subr.bf16.mxu0 0
        %800 = vmatpush2.bf16.xpose.msra.mxu0 0
        %801 = vmatprep.subr.bf16.mxu0 0
        %802 = vmatpush2.bf16.xpose.msra.mxu0 0
        %803 = vmatprep.subr.bf16.mxu0 0
        %804 = vmatpush2.bf16.xpose.msra.mxu0 0
        %805 = vmatprep.subr.bf16.mxu0 0
        %806 = vmatpush2.bf16.xpose.msra.mxu0 0
        %807 = vmatprep.subr.bf16.mxu0 0
        %808 = vmatpush2.bf16.xpose.msra.mxu0 0
        %809 = vmatprep.mubr.bf16.mxu0 0
        %810 = vmatmul.mubr.bf16.gmra.mxu0 %v775
        %v811 = vpop.f32.mrf.mxu0
        %v812 = vadd.f32 0.0, %v811
        %v813 = vpop.f32.mrf.mxu0
        %v814 = vpop.f32.mrf.mxu0
        %v815 = vpop.f32.mrf.mxu0
        %816 = vdwg.mxu0
        %v817 = vmul.f32 %v812, 0.088388346
        %vm818 = vcmask 64512
        %v819 = vsel %vm818, %v817, -inf
        %820 = vmax.xlane.f32.xlu0 %v819
        %v821 = vpop.xlane.xlu0 %820
        %v822 = vsub.f32 %v817, %v821
        %v823 = vmul.f32 %v822, 1.442695
        %v824 = vpow.pop %v823
        %v825 = vsel %vm818, %v824, 0.0
        %826 = vadd.xlane.f32.xlu0 %v825
        %v827 = vpop.xlane.xlu0 %826
        %v828 = vrcp.pop %v827
        %v829 = vmul.f32 %v824, %v828
        %v830 = vpack.c.bf16 %v829, %v829
        %v831 = vpack.c.bf16 %v770, %v770
        %v833 = vsel %vm818, %v830, 0
        %vm835 = vcmask 1043456
        %v837 = vsel %vm835, %v831, 0
        %839 = vmatprep.subr.bf16.mxu0 0
        %840 = vmatpush1.bf16.msra.mxu0 0
        %841 = vmatprep.subr.bf16.mxu0 0
        %842 = vmatpush1.bf16.msra.mxu0 0
        %843 = vmatprep.subr.bf16.mxu0 0
        %844 = vmatpush1.bf16.msra.mxu0 0
        %845 = vmatprep.subr.bf16.mxu0 0
        %846 = vmatpush1.bf16.msra.mxu0 0
        %847 = vmatprep.subr.bf16.mxu0 0
        %848 = vmatpush1.bf16.msra.mxu0 0
        %849 = vmatprep.subr.bf16.mxu0 0
        %850 = vmatpush1.bf16.msra.mxu0 0
        %851 = vmatprep.subr.bf16.mxu0 0
        %852 = vmatpush1.bf16.msra.mxu0 0
        %853 = vmatprep.subr.bf16.mxu0 0
        %854 = vmatpush1.bf16.msra.mxu0 %v837
        %855 = vmatprep.subr.bf16.mxu0 0
        %856 = vmatpush2.bf16.msra.mxu0 0
        %857 = vmatprep.subr.bf16.mxu0 0
        %858 = vmatpush2.bf16.msra.mxu0 0
        %859 = vmatprep.subr.bf16.mxu0 0
        %860 = vmatpush2.bf16.msra.mxu0 0
        %861 = vmatprep.subr.bf16.mxu0 0
        %862 = vmatpush2.bf16.msra.mxu0 0
        %863 = vmatprep.subr.bf16.mxu0 0
        %864 = vmatpush2.bf16.msra.mxu0 0
        %865 = vmatprep.subr.bf16.mxu0 0
        %866 = vmatpush2.bf16.msra.mxu0 0
        %867 = vmatprep.subr.bf16.mxu0 0
        %868 = vmatpush2.bf16.msra.mxu0 0
        %869 = vmatprep.subr.bf16.mxu0 0
        %870 = vmatpush2.bf16.msra.mxu0 0
        %871 = vmatprep.mubr.bf16.mxu0 0
        %872 = vmatmul.mubr.bf16.gmra.mxu0 %v833
        %v873 = vpop.f32.mrf.mxu0
        %v874 = vadd.f32 0.0, %v873
        %v875 = vpop.f32.mrf.mxu0
        %v876 = vpop.f32.mrf.mxu0
        %v877 = vpop.f32.mrf.mxu0
        %878 = vdwg.mxu0
        %v879 = vpack.c.bf16 %v874, %v874
        %s880 = scalar_lea.vmem [#allocation9], 192
        %v881 = vld [vmem:[%s880] sm:$0xf]
        %v882 = vld [vmem:[%s880 + $0x4] sm:$0xf]
        %v883 = vld [vmem:[%s880 + $0x8] sm:$0xf]
        %v884 = vld [vmem:[%s880 + $0xc] sm:$0xf]
        %v885 = vld [vmem:[%s880 + $0x10] sm:$0xf]
        %v886 = vld [vmem:[%s880 + $0x14] sm:$0xf]
        %v887 = vld [vmem:[%s880 + $0x18] sm:$0xf]
        %v888 = vld [vmem:[%s880 + $0x1c] sm:$0xf]
        %v889 = vld [vmem:[%s880 + $0x20] sm:$0xf]
        %v890 = vld [vmem:[%s880 + $0x24] sm:$0xf]
        %v891 = vld [vmem:[%s880 + $0x28] sm:$0xf]
        %v892 = vld [vmem:[%s880 + $0x2c] sm:$0xf]
        %v893 = vld [vmem:[%s880 + $0x30] sm:$0xf]
        %v894 = vld [vmem:[%s880 + $0x34] sm:$0xf]
        %v895 = vld [vmem:[%s880 + $0x38] sm:$0xf]
        %v896 = vld [vmem:[%s880 + $0x3c] sm:$0xf]
        %v897 = vld [vmem:[#allocation12 + $0x5] sm:$0x1]
        %v898 = vlaneseq
        %v899 = vshrl.u32 %v898, 7
        %v900 = vsub.s32 0, %v899
        %v901 = vrot.slane %v897, %v900
        %v918 = vunpack.c.l.b16 %v881
        %v919 = vunpack.c.l.b16 %v882
        %v920 = vunpack.c.l.b16 %v883
        %v921 = vunpack.c.l.b16 %v884
        %v922 = vunpack.c.l.b16 %v885
        %v923 = vunpack.c.l.b16 %v886
        %v924 = vunpack.c.l.b16 %v887
        %v925 = vunpack.c.l.b16 %v888
        %v926 = vunpack.c.l.b16 %v889
        %v927 = vunpack.c.l.b16 %v890
        %v928 = vunpack.c.l.b16 %v891
        %v929 = vunpack.c.l.b16 %v892
        %v930 = vunpack.c.l.b16 %v893
        %v931 = vunpack.c.l.b16 %v894
        %v932 = vunpack.c.l.b16 %v895
        %v933 = vunpack.c.l.b16 %v896
        %v934 = vpack.c.b16 %v919, %v918
        %v935 = vpack.c.b16 %v921, %v920
        %v936 = vpack.c.b16 %v923, %v922
        %v937 = vpack.c.b16 %v925, %v924
        %v938 = vpack.c.b16 %v927, %v926
        %v939 = vpack.c.b16 %v929, %v928
        %v940 = vpack.c.b16 %v931, %v930
        %v941 = vpack.c.b16 %v933, %v932
        %950 = vmatprep.subr.bf16.mxu0 0
        %951 = vmatpush1.bf16.msra.mxu0 %v941
        %952 = vmatprep.subr.bf16.mxu0 0
        %953 = vmatpush1.bf16.msra.mxu0 %v940
        %954 = vmatprep.subr.bf16.mxu0 0
        %955 = vmatpush1.bf16.msra.mxu0 %v939
        %956 = vmatprep.subr.bf16.mxu0 0
        %957 = vmatpush1.bf16.msra.mxu0 %v938
        %958 = vmatprep.subr.bf16.mxu0 0
        %959 = vmatpush1.bf16.msra.mxu0 %v937
        %960 = vmatprep.subr.bf16.mxu0 0
        %961 = vmatpush1.bf16.msra.mxu0 %v936
        %962 = vmatprep.subr.bf16.mxu0 0
        %963 = vmatpush1.bf16.msra.mxu0 %v935
        %964 = vmatprep.subr.bf16.mxu0 0
        %965 = vmatpush1.bf16.msra.mxu0 %v934
        %966 = vmatprep.subr.bf16.mxu0 0
        %967 = vmatpush2.bf16.msra.mxu0 0
        %968 = vmatprep.subr.bf16.mxu0 0
        %969 = vmatpush2.bf16.msra.mxu0 0
        %970 = vmatprep.subr.bf16.mxu0 0
        %971 = vmatpush2.bf16.msra.mxu0 0
        %972 = vmatprep.subr.bf16.mxu0 0
        %973 = vmatpush2.bf16.msra.mxu0 0
        %974 = vmatprep.subr.bf16.mxu0 0
        %975 = vmatpush2.bf16.msra.mxu0 0
        %976 = vmatprep.subr.bf16.mxu0 0
        %977 = vmatpush2.bf16.msra.mxu0 0
        %978 = vmatprep.subr.bf16.mxu0 0
        %979 = vmatpush2.bf16.msra.mxu0 0
        %980 = vmatprep.subr.bf16.mxu0 0
        %981 = vmatpush2.bf16.msra.mxu0 0
        %982 = vmatprep.mubr.bf16.mxu0 0
        %983 = vmatmul.mubr.bf16.gmra.mxu0 %v879
        %v984 = vpop.f32.mrf.mxu0
        %v985 = vadd.f32 %v901, %v984
        %v986 = vpop.f32.mrf.mxu0
        %v987 = vpop.f32.mrf.mxu0
        %v988 = vpop.f32.mrf.mxu0
        %989 = vdwg.mxu0
        %v990 = vadd.f32 %v444, %v985
        %v991 = vld [vmem:[#allocation12 + $0x6] sm:$0x1]
        %v992 = vld [vmem:[#allocation12 + $0x7] sm:$0x1]
        %993 = vadd.xlane.f32.xlu0 %v990
        %v994 = vpop.xlane.xlu0 %993
        %v995 = vmul.f32 %v994, %v425
        %v996 = vsub.f32 %v990, %v995
        %v997 = vmul.f32 %v996, %v996
        %998 = vadd.xlane.f32.xlu0 %v997
        %v999 = vpop.xlane.xlu0 %998
        %v1000 = vmul.f32 %v999, %v425
        %v1001 = vadd.f32 %v1000, 1e-12
        %v1002 = vrsqrt.pop %v1001
        %v1003 = vmul.f32 %v996, %v1002
        %v1004 = vlaneseq
        %v1005 = vshrl.u32 %v1004, 7
        %v1006 = vsub.s32 0, %v1005
        %v1007 = vrot.slane %v991, %v1006
        %v1008 = vmul.f32 %v1003, %v1007
        %v1009 = vlaneseq
        %v1010 = vshrl.u32 %v1009, 7
        %v1011 = vsub.s32 0, %v1010
        %v1012 = vrot.slane %v992, %v1011
        %v1013 = vadd.f32 %v1008, %v1012
        %v1014 = vpack.c.bf16 %v1013, %v1013
        %v1015 = vld [vmem:[#allocation11] sm:$0xff]
        %v1016 = vld [vmem:[#allocation11 + $0x8] sm:$0xff]
        %v1017 = vld [vmem:[#allocation11 + $0x10] sm:$0xff]
        %v1018 = vld [vmem:[#allocation11 + $0x18] sm:$0xff]
        %v1019 = vld [vmem:[#allocation11 + $0x20] sm:$0xff]
        %v1020 = vld [vmem:[#allocation11 + $0x28] sm:$0xff]
        %v1021 = vld [vmem:[#allocation11 + $0x30] sm:$0xff]
        %v1022 = vld [vmem:[#allocation11 + $0x38] sm:$0xff]
        %v1023 = vld [vmem:[#allocation11 + $0x40] sm:$0xff]
        %v1024 = vld [vmem:[#allocation11 + $0x48] sm:$0xff]
        %v1025 = vld [vmem:[#allocation11 + $0x50] sm:$0xff]
        %v1026 = vld [vmem:[#allocation11 + $0x58] sm:$0xff]
        %v1027 = vld [vmem:[#allocation11 + $0x60] sm:$0xff]
        %v1028 = vld [vmem:[#allocation11 + $0x68] sm:$0xff]
        %v1029 = vld [vmem:[#allocation11 + $0x70] sm:$0xff]
        %v1030 = vld [vmem:[#allocation11 + $0x78] sm:$0xff]
        %v1031 = vld [vmem:[#allocation11 + $0x80] sm:$0xff]
        %v1032 = vld [vmem:[#allocation11 + $0x88] sm:$0xff]
        %v1033 = vld [vmem:[#allocation11 + $0x90] sm:$0xff]
        %v1034 = vld [vmem:[#allocation11 + $0x98] sm:$0xff]
        %v1035 = vld [vmem:[#allocation11 + $0xa0] sm:$0xff]
        %v1036 = vld [vmem:[#allocation11 + $0xa8] sm:$0xff]
        %v1037 = vld [vmem:[#allocation11 + $0xb0] sm:$0xff]
        %v1038 = vld [vmem:[#allocation11 + $0xb8] sm:$0xff]
        %v1039 = vld [vmem:[#allocation11 + $0xc0] sm:$0xff]
        %v1040 = vld [vmem:[#allocation11 + $0xc8] sm:$0xff]
        %v1041 = vld [vmem:[#allocation11 + $0xd0] sm:$0xff]
        %v1042 = vld [vmem:[#allocation11 + $0xd8] sm:$0xff]
        %v1043 = vld [vmem:[#allocation11 + $0xe0] sm:$0xff]
        %v1044 = vld [vmem:[#allocation11 + $0xe8] sm:$0xff]
        %v1045 = vld [vmem:[#allocation11 + $0xf0] sm:$0xff]
        %v1046 = vld [vmem:[#allocation11 + $0xf8] sm:$0xff]
        %v1047 = vld [vmem:[%s6] sm:$0xf]
        %v1049 = vlaneseq
        %v1050 = vshrl.u32 %v1049, 7
        %v1051 = vsub.s32 0, %v1050
        %v1052 = vrot.slane %v1047, %v1051
        %v1053 = vlaneseq
        %v1054 = vshrl.u32 %v1053, 7
        %v1055 = vsub.s32 1, %v1054
        %v1056 = vrot.slane %v1047, %v1055
        %v1057 = vlaneseq
        %v1058 = vshrl.u32 %v1057, 7
        %v1059 = vsub.s32 2, %v1058
        %v1060 = vrot.slane %v1047, %v1059
        %v1061 = vlaneseq
        %v1062 = vshrl.u32 %v1061, 7
        %v1063 = vsub.s32 3, %v1062
        %v1064 = vrot.slane %v1047, %v1063
        %v1101 = vunpack.c.l.b16 %v1015
        %v1102 = vunpack.c.h.b16 %v1015
        %v1103 = vunpack.c.l.b16 %v1016
        %v1104 = vunpack.c.h.b16 %v1016
        %v1105 = vunpack.c.l.b16 %v1017
        %v1106 = vunpack.c.h.b16 %v1017
        %v1107 = vunpack.c.l.b16 %v1018
        %v1108 = vunpack.c.h.b16 %v1018
        %v1109 = vunpack.c.l.b16 %v1019
        %v1110 = vunpack.c.h.b16 %v1019
        %v1111 = vunpack.c.l.b16 %v1020
        %v1112 = vunpack.c.h.b16 %v1020
        %v1113 = vunpack.c.l.b16 %v1021
        %v1114 = vunpack.c.h.b16 %v1021
        %v1115 = vunpack.c.l.b16 %v1022
        %v1116 = vunpack.c.h.b16 %v1022
        %v1117 = vunpack.c.l.b16 %v1023
        %v1118 = vunpack.c.h.b16 %v1023
        %v1119 = vunpack.c.l.b16 %v1024
        %v1120 = vunpack.c.h.b16 %v1024
        %v1121 = vunpack.c.l.b16 %v1025
        %v1122 = vunpack.c.h.b16 %v1025
        %v1123 = vunpack.c.l.b16 %v1026
        %v1124 = vunpack.c.h.b16 %v1026
        %v1125 = vunpack.c.l.b16 %v1027
        %v1126 = vunpack.c.h.b16 %v1027
        %v1127 = vunpack.c.l.b16 %v1028
        %v1128 = vunpack.c.h.b16 %v1028
        %v1129 = vunpack.c.l.b16 %v1029
        %v1130 = vunpack.c.h.b16 %v1029
        %v1131 = vunpack.c.l.b16 %v1030
        %v1132 = vunpack.c.h.b16 %v1030
        %v1133 = vunpack.c.l.b16 %v1031
        %v1134 = vunpack.c.h.b16 %v1031
        %v1135 = vunpack.c.l.b16 %v1032
        %v1136 = vunpack.c.h.b16 %v1032
        %v1137 = vunpack.c.l.b16 %v1033
        %v1138 = vunpack.c.h.b16 %v1033
        %v1139 = vunpack.c.l.b16 %v1034
        %v1140 = vunpack.c.h.b16 %v1034
        %v1141 = vunpack.c.l.b16 %v1035
        %v1142 = vunpack.c.h.b16 %v1035
        %v1143 = vunpack.c.l.b16 %v1036
        %v1144 = vunpack.c.h.b16 %v1036
        %v1145 = vunpack.c.l.b16 %v1037
        %v1146 = vunpack.c.h.b16 %v1037
        %v1147 = vunpack.c.l.b16 %v1038
        %v1148 = vunpack.c.h.b16 %v1038
        %v1149 = vunpack.c.l.b16 %v1039
        %v1150 = vunpack.c.h.b16 %v1039
        %v1151 = vunpack.c.l.b16 %v1040
        %v1152 = vunpack.c.h.b16 %v1040
        %v1153 = vunpack.c.l.b16 %v1041
        %v1154 = vunpack.c.h.b16 %v1041
        %v1155 = vunpack.c.l.b16 %v1042
        %v1156 = vunpack.c.h.b16 %v1042
        %v1157 = vunpack.c.l.b16 %v1043
        %v1158 = vunpack.c.h.b16 %v1043
        %v1159 = vunpack.c.l.b16 %v1044
        %v1160 = vunpack.c.h.b16 %v1044
        %v1161 = vunpack.c.l.b16 %v1045
        %v1162 = vunpack.c.h.b16 %v1045
        %v1163 = vunpack.c.l.b16 %v1046
        %v1164 = vunpack.c.h.b16 %v1046
        %v1165 = vpack.c.b16 %v1105, %v1101
        %v1166 = vpack.c.b16 %v1106, %v1102
        %v1167 = vpack.c.b16 %v1107, %v1103
        %v1168 = vpack.c.b16 %v1108, %v1104
        %v1169 = vpack.c.b16 %v1113, %v1109
        %v1170 = vpack.c.b16 %v1114, %v1110
        %v1171 = vpack.c.b16 %v1115, %v1111
        %v1172 = vpack.c.b16 %v1116, %v1112
        %v1173 = vpack.c.b16 %v1121, %v1117
        %v1174 = vpack.c.b16 %v1122, %v1118
        %v1175 = vpack.c.b16 %v1123, %v1119
        %v1176 = vpack.c.b16 %v1124, %v1120
        %v1177 = vpack.c.b16 %v1129, %v1125
        %v1178 = vpack.c.b16 %v1130, %v1126
        %v1179 = vpack.c.b16 %v1131, %v1127
        %v1180 = vpack.c.b16 %v1132, %v1128
        %v1181 = vpack.c.b16 %v1137, %v1133
        %v1182 = vpack.c.b16 %v1138, %v1134
        %v1183 = vpack.c.b16 %v1139, %v1135
        %v1184 = vpack.c.b16 %v1140, %v1136
        %v1185 = vpack.c.b16 %v1145, %v1141
        %v1186 = vpack.c.b16 %v1146, %v1142
        %v1187 = vpack.c.b16 %v1147, %v1143
        %v1188 = vpack.c.b16 %v1148, %v1144
        %v1189 = vpack.c.b16 %v1153, %v1149
        %v1190 = vpack.c.b16 %v1154, %v1150
        %v1191 = vpack.c.b16 %v1155, %v1151
        %v1192 = vpack.c.b16 %v1156, %v1152
        %v1193 = vpack.c.b16 %v1161, %v1157
        %v1194 = vpack.c.b16 %v1162, %v1158
        %v1195 = vpack.c.b16 %v1163, %v1159
        %v1196 = vpack.c.b16 %v1164, %v1160
        %1229 = vmatprep.subr.bf16.mxu0 %v1194
        %1230 = vmatpush1.bf16.msra.mxu0 %v1193
        %1231 = vmatprep.subr.bf16.mxu0 %v1190
        %1232 = vmatpush1.bf16.msra.mxu0 %v1189
        %1233 = vmatprep.subr.bf16.mxu0 %v1186
        %1234 = vmatpush1.bf16.msra.mxu0 %v1185
        %1235 = vmatprep.subr.bf16.mxu0 %v1182
        %1236 = vmatpush1.bf16.msra.mxu0 %v1181
        %1237 = vmatprep.subr.bf16.mxu0 %v1178
        %1238 = vmatpush1.bf16.msra.mxu0 %v1177
        %1239 = vmatprep.subr.bf16.mxu0 %v1174
        %1240 = vmatpush1.bf16.msra.mxu0 %v1173
        %1241 = vmatprep.subr.bf16.mxu0 %v1170
        %1242 = vmatpush1.bf16.msra.mxu0 %v1169
        %1243 = vmatprep.subr.bf16.mxu0 %v1166
        %1244 = vmatpush1.bf16.msra.mxu0 %v1165
        %1245 = vmatprep.subr.bf16.mxu0 0
        %1246 = vmatpush2.bf16.msra.mxu0 0
        %1247 = vmatprep.subr.bf16.mxu0 0
        %1248 = vmatpush2.bf16.msra.mxu0 0
        %1249 = vmatprep.subr.bf16.mxu0 0
        %1250 = vmatpush2.bf16.msra.mxu0 0
        %1251 = vmatprep.subr.bf16.mxu0 0
        %1252 = vmatpush2.bf16.msra.mxu0 0
        %1253 = vmatprep.subr.bf16.mxu0 0
        %1254 = vmatpush2.bf16.msra.mxu0 0
        %1255 = vmatprep.subr.bf16.mxu0 0
        %1256 = vmatpush2.bf16.msra.mxu0 0
        %1257 = vmatprep.subr.bf16.mxu0 0
        %1258 = vmatpush2.bf16.msra.mxu0 0
        %1259 = vmatprep.subr.bf16.mxu0 0
        %1260 = vmatpush2.bf16.msra.mxu0 0
        %1261 = vmatprep.mubr.bf16.mxu0 0
        %1262 = vmatmul.mubr.bf16.gmra.mxu0 %v1014
        %v1263 = vpop.f32.mrf.mxu0
        %v1264 = vadd.f32 %v1052, %v1263
        %v1265 = vpop.f32.mrf.mxu0
        %v1266 = vadd.f32 %v1056, %v1265
        %v1267 = vpop.f32.mrf.mxu0
        %v1268 = vpop.f32.mrf.mxu0
        %1269 = vdwg.mxu0
        %1270 = vmatprep.subr.bf16.mxu0 %v1196
        %1271 = vmatpush1.bf16.msra.mxu0 %v1195
        %1272 = vmatprep.subr.bf16.mxu0 %v1192
        %1273 = vmatpush1.bf16.msra.mxu0 %v1191
        %1274 = vmatprep.subr.bf16.mxu0 %v1188
        %1275 = vmatpush1.bf16.msra.mxu0 %v1187
        %1276 = vmatprep.subr.bf16.mxu0 %v1184
        %1277 = vmatpush1.bf16.msra.mxu0 %v1183
        %1278 = vmatprep.subr.bf16.mxu0 %v1180
        %1279 = vmatpush1.bf16.msra.mxu0 %v1179
        %1280 = vmatprep.subr.bf16.mxu0 %v1176
        %1281 = vmatpush1.bf16.msra.mxu0 %v1175
        %1282 = vmatprep.subr.bf16.mxu0 %v1172
        %1283 = vmatpush1.bf16.msra.mxu0 %v1171
        %1284 = vmatprep.subr.bf16.mxu0 %v1168
        %1285 = vmatpush1.bf16.msra.mxu0 %v1167
        %1286 = vmatprep.subr.bf16.mxu0 0
        %1287 = vmatpush2.bf16.msra.mxu0 0
        %1288 = vmatprep.subr.bf16.mxu0 0
        %1289 = vmatpush2.bf16.msra.mxu0 0
        %1290 = vmatprep.subr.bf16.mxu0 0
        %1291 = vmatpush2.bf16.msra.mxu0 0
        %1292 = vmatprep.subr.bf16.mxu0 0
        %1293 = vmatpush2.bf16.msra.mxu0 0
        %1294 = vmatprep.subr.bf16.mxu0 0
        %1295 = vmatpush2.bf16.msra.mxu0 0
        %1296 = vmatprep.subr.bf16.mxu0 0
        %1297 = vmatpush2.bf16.msra.mxu0 0
        %1298 = vmatprep.subr.bf16.mxu0 0
        %1299 = vmatpush2.bf16.msra.mxu0 0
        %1300 = vmatprep.subr.bf16.mxu0 0
        %1301 = vmatpush2.bf16.msra.mxu0 0
        %1302 = vmatprep.mubr.bf16.mxu0 0
        %1303 = vmatmul.mubr.bf16.gmra.mxu0 %v1014
        %v1304 = vpop.f32.mrf.mxu0
        %v1305 = vadd.f32 %v1060, %v1304
        %v1306 = vpop.f32.mrf.mxu0
        %v1307 = vadd.f32 %v1064, %v1306
        %v1308 = vpop.f32.mrf.mxu0
        %v1309 = vpop.f32.mrf.mxu0
        %1310 = vdwg.mxu0
        %v1311 = vmul.f32 %v1264, %v1264
        %v1312 = vmul.f32 %v1266, %v1266
        %v1313 = vmul.f32 %v1305, %v1305
        %v1314 = vmul.f32 %v1307, %v1307
        %v1315 = vmul.f32 %v1264, %v1311
        %v1316 = vmul.f32 %v1266, %v1312
        %v1317 = vmul.f32 %v1305, %v1313
        %v1318 = vmul.f32 %v1307, %v1314
        %v1319 = vmul.f32 %v1315, 0.044715
        %v1320 = vmul.f32 %v1316, 0.044715
        %v1321 = vmul.f32 %v1317, 0.044715
        %v1322 = vmul.f32 %v1318, 0.044715
        %v1323 = vadd.f32 %v1264, %v1319
        %v1324 = vadd.f32 %v1266, %v1320
        %v1325 = vadd.f32 %v1305, %v1321
        %v1326 = vadd.f32 %v1307, %v1322
        %v1327 = vmul.f32 %v1323, 0.7978846
        %v1328 = vmul.f32 %v1324, 0.7978846
        %v1329 = vmul.f32 %v1325, 0.7978846
        %v1330 = vmul.f32 %v1326, 0.7978846
        %v1331 = vtanh.pop %v1327
        %v1332 = vtanh.pop %v1328
        %v1333 = vtanh.pop %v1329
        %v1334 = vtanh.pop %v1330
        %v1335 = vadd.f32 %v1331, 1.0
        %v1336 = vadd.f32 %v1332, 1.0
        %v1337 = vadd.f32 %v1333, 1.0
        %v1338 = vadd.f32 %v1334, 1.0
        %v1339 = vmul.f32 %v1335, 0.5
        %v1340 = vmul.f32 %v1336, 0.5
        %v1341 = vmul.f32 %v1337, 0.5
        %v1342 = vmul.f32 %v1338, 0.5
        %v1343 = vmul.f32 %v1264, %v1339
        %v1344 = vmul.f32 %v1266, %v1340
        %v1345 = vmul.f32 %v1305, %v1341
        %v1346 = vmul.f32 %v1307, %v1342
        %v1347 = vpack.c.bf16 %v1343, %v1343
        %v1348 = vpack.c.bf16 %v1344, %v1344
        %v1349 = vpack.c.bf16 %v1345, %v1345
        %v1350 = vpack.c.bf16 %v1346, %v1346
        %s1351 = scalar_lea.vmem [#allocation11], 256
        %v1352 = vld [vmem:[%s1351] sm:$0xff]
        %v1353 = vld [vmem:[%s1351 + $0x8] sm:$0xff]
        %v1354 = vld [vmem:[%s1351 + $0x10] sm:$0xff]
        %v1355 = vld [vmem:[%s1351 + $0x18] sm:$0xff]
        %v1356 = vld [vmem:[%s1351 + $0x20] sm:$0xff]
        %v1357 = vld [vmem:[%s1351 + $0x28] sm:$0xff]
        %v1358 = vld [vmem:[%s1351 + $0x30] sm:$0xff]
        %v1359 = vld [vmem:[%s1351 + $0x38] sm:$0xff]
        %v1360 = vld [vmem:[%s1351 + $0x40] sm:$0xff]
        %v1361 = vld [vmem:[%s1351 + $0x48] sm:$0xff]
        %v1362 = vld [vmem:[%s1351 + $0x50] sm:$0xff]
        %v1363 = vld [vmem:[%s1351 + $0x58] sm:$0xff]
        %v1364 = vld [vmem:[%s1351 + $0x60] sm:$0xff]
        %v1365 = vld [vmem:[%s1351 + $0x68] sm:$0xff]
        %v1366 = vld [vmem:[%s1351 + $0x70] sm:$0xff]
        %v1367 = vld [vmem:[%s1351 + $0x78] sm:$0xff]
        %v1368 = vld [vmem:[%s1351 + $0x80] sm:$0xff]
        %v1369 = vld [vmem:[%s1351 + $0x88] sm:$0xff]
        %v1370 = vld [vmem:[%s1351 + $0x90] sm:$0xff]
        %v1371 = vld [vmem:[%s1351 + $0x98] sm:$0xff]
        %v1372 = vld [vmem:[%s1351 + $0xa0] sm:$0xff]
        %v1373 = vld [vmem:[%s1351 + $0xa8] sm:$0xff]
        %v1374 = vld [vmem:[%s1351 + $0xb0] sm:$0xff]
        %v1375 = vld [vmem:[%s1351 + $0xb8] sm:$0xff]
        %v1376 = vld [vmem:[%s1351 + $0xc0] sm:$0xff]
        %v1377 = vld [vmem:[%s1351 + $0xc8] sm:$0xff]
        %v1378 = vld [vmem:[%s1351 + $0xd0] sm:$0xff]
        %v1379 = vld [vmem:[%s1351 + $0xd8] sm:$0xff]
        %v1380 = vld [vmem:[%s1351 + $0xe0] sm:$0xff]
        %v1381 = vld [vmem:[%s1351 + $0xe8] sm:$0xff]
        %v1382 = vld [vmem:[%s1351 + $0xf0] sm:$0xff]
        %v1383 = vld [vmem:[%s1351 + $0xf8] sm:$0xff]
        %v1384 = vld [vmem:[#allocation12 + $0x8] sm:$0x1]
        %v1385 = vlaneseq
        %v1386 = vshrl.u32 %v1385, 7
        %v1387 = vsub.s32 0, %v1386
        %v1388 = vrot.slane %v1384, %v1387
        %v1421 = vunpack.c.l.b16 %v1352
        %v1422 = vunpack.c.h.b16 %v1352
        %v1423 = vunpack.c.l.b16 %v1353
        %v1424 = vunpack.c.h.b16 %v1353
        %v1425 = vunpack.c.l.b16 %v1354
        %v1426 = vunpack.c.h.b16 %v1354
        %v1427 = vunpack.c.l.b16 %v1355
        %v1428 = vunpack.c.h.b16 %v1355
        %v1429 = vunpack.c.l.b16 %v1356
        %v1430 = vunpack.c.h.b16 %v1356
        %v1431 = vunpack.c.l.b16 %v1357
        %v1432 = vunpack.c.h.b16 %v1357
        %v1433 = vunpack.c.l.b16 %v1358
        %v1434 = vunpack.c.h.b16 %v1358
        %v1435 = vunpack.c.l.b16 %v1359
        %v1436 = vunpack.c.h.b16 %v1359
        %v1437 = vunpack.c.l.b16 %v1360
        %v1438 = vunpack.c.h.b16 %v1360
        %v1439 = vunpack.c.l.b16 %v1361
        %v1440 = vunpack.c.h.b16 %v1361
        %v1441 = vunpack.c.l.b16 %v1362
        %v1442 = vunpack.c.h.b16 %v1362
        %v1443 = vunpack.c.l.b16 %v1363
        %v1444 = vunpack.c.h.b16 %v1363
        %v1445 = vunpack.c.l.b16 %v1364
        %v1446 = vunpack.c.h.b16 %v1364
        %v1447 = vunpack.c.l.b16 %v1365
        %v1448 = vunpack.c.h.b16 %v1365
        %v1449 = vunpack.c.l.b16 %v1366
        %v1450 = vunpack.c.h.b16 %v1366
        %v1451 = vunpack.c.l.b16 %v1367
        %v1452 = vunpack.c.h.b16 %v1367
        %v1453 = vunpack.c.l.b16 %v1368
        %v1454 = vunpack.c.h.b16 %v1368
        %v1455 = vunpack.c.l.b16 %v1369
        %v1456 = vunpack.c.h.b16 %v1369
        %v1457 = vunpack.c.l.b16 %v1370
        %v1458 = vunpack.c.h.b16 %v1370
        %v1459 = vunpack.c.l.b16 %v1371
        %v1460 = vunpack.c.h.b16 %v1371
        %v1461 = vunpack.c.l.b16 %v1372
        %v1462 = vunpack.c.h.b16 %v1372
        %v1463 = vunpack.c.l.b16 %v1373
        %v1464 = vunpack.c.h.b16 %v1373
        %v1465 = vunpack.c.l.b16 %v1374
        %v1466 = vunpack.c.h.b16 %v1374
        %v1467 = vunpack.c.l.b16 %v1375
        %v1468 = vunpack.c.h.b16 %v1375
        %v1469 = vunpack.c.l.b16 %v1376
        %v1470 = vunpack.c.h.b16 %v1376
        %v1471 = vunpack.c.l.b16 %v1377
        %v1472 = vunpack.c.h.b16 %v1377
        %v1473 = vunpack.c.l.b16 %v1378
        %v1474 = vunpack.c.h.b16 %v1378
        %v1475 = vunpack.c.l.b16 %v1379
        %v1476 = vunpack.c.h.b16 %v1379
        %v1477 = vunpack.c.l.b16 %v1380
        %v1478 = vunpack.c.h.b16 %v1380
        %v1479 = vunpack.c.l.b16 %v1381
        %v1480 = vunpack.c.h.b16 %v1381
        %v1481 = vunpack.c.l.b16 %v1382
        %v1482 = vunpack.c.h.b16 %v1382
        %v1483 = vunpack.c.l.b16 %v1383
        %v1484 = vunpack.c.h.b16 %v1383
        %v1485 = vpack.c.b16 %v1425, %v1421
        %v1486 = vpack.c.b16 %v1426, %v1422
        %v1487 = vpack.c.b16 %v1427, %v1423
        %v1488 = vpack.c.b16 %v1428, %v1424
        %v1489 = vpack.c.b16 %v1433, %v1429
        %v1490 = vpack.c.b16 %v1434, %v1430
        %v1491 = vpack.c.b16 %v1435, %v1431
        %v1492 = vpack.c.b16 %v1436, %v1432
        %v1493 = vpack.c.b16 %v1441, %v1437
        %v1494 = vpack.c.b16 %v1442, %v1438
        %v1495 = vpack.c.b16 %v1443, %v1439
        %v1496 = vpack.c.b16 %v1444, %v1440
        %v1497 = vpack.c.b16 %v1449, %v1445
        %v1498 = vpack.c.b16 %v1450, %v1446
        %v1499 = vpack.c.b16 %v1451, %v1447
        %v1500 = vpack.c.b16 %v1452, %v1448
        %v1501 = vpack.c.b16 %v1457, %v1453
        %v1502 = vpack.c.b16 %v1458, %v1454
        %v1503 = vpack.c.b16 %v1459, %v1455
        %v1504 = vpack.c.b16 %v1460, %v1456
        %v1505 = vpack.c.b16 %v1465, %v1461
        %v1506 = vpack.c.b16 %v1466, %v1462
        %v1507 = vpack.c.b16 %v1467, %v1463
        %v1508 = vpack.c.b16 %v1468, %v1464
        %v1509 = vpack.c.b16 %v1473, %v1469
        %v1510 = vpack.c.b16 %v1474, %v1470
        %v1511 = vpack.c.b16 %v1475, %v1471
        %v1512 = vpack.c.b16 %v1476, %v1472
        %v1513 = vpack.c.b16 %v1481, %v1477
        %v1514 = vpack.c.b16 %v1482, %v1478
        %v1515 = vpack.c.b16 %v1483, %v1479
        %v1516 = vpack.c.b16 %v1484, %v1480
        %1549 = vmatprep.subr.bf16.mxu0 %v1514
        %1550 = vmatpush1.bf16.xpose.msra.mxu0 %v1513
        %1551 = vmatprep.subr.bf16.mxu0 %v1510
        %1552 = vmatpush1.bf16.xpose.msra.mxu0 %v1509
        %1553 = vmatprep.subr.bf16.mxu0 %v1506
        %1554 = vmatpush1.bf16.xpose.msra.mxu0 %v1505
        %1555 = vmatprep.subr.bf16.mxu0 %v1502
        %1556 = vmatpush1.bf16.xpose.msra.mxu0 %v1501
        %1557 = vmatprep.subr.bf16.mxu0 %v1498
        %1558 = vmatpush1.bf16.xpose.msra.mxu0 %v1497
        %1559 = vmatprep.subr.bf16.mxu0 %v1494
        %1560 = vmatpush1.bf16.xpose.msra.mxu0 %v1493
        %1561 = vmatprep.subr.bf16.mxu0 %v1490
        %1562 = vmatpush1.bf16.xpose.msra.mxu0 %v1489
        %1563 = vmatprep.subr.bf16.mxu0 %v1486
        %1564 = vmatpush1.bf16.xpose.msra.mxu0 %v1485
        %1565 = vmatprep.subr.bf16.mxu0 0
        %1566 = vmatpush2.bf16.xpose.msra.mxu0 0
        %1567 = vmatprep.subr.bf16.mxu0 0
        %1568 = vmatpush2.bf16.xpose.msra.mxu0 0
        %1569 = vmatprep.subr.bf16.mxu0 0
        %1570 = vmatpush2.bf16.xpose.msra.mxu0 0
        %1571 = vmatprep.subr.bf16.mxu0 0
        %1572 = vmatpush2.bf16.xpose.msra.mxu0 0
        %1573 = vmatprep.subr.bf16.mxu0 0
        %1574 = vmatpush2.bf16.xpose.msra.mxu0 0
        %1575 = vmatprep.subr.bf16.mxu0 0
        %1576 = vmatpush2.bf16.xpose.msra.mxu0 0
        %1577 = vmatprep.subr.bf16.mxu0 0
        %1578 = vmatpush2.bf16.xpose.msra.mxu0 0
        %1579 = vmatprep.subr.bf16.mxu0 0
        %1580 = vmatpush2.bf16.xpose.msra.mxu0 0
        %1581 = vmatprep.mubr.bf16.mxu0 %v1348
        %1582 = vmatmul.mubr.bf16.gmra.mxu0 %v1347
        %v1583 = vpop.f32.mrf.mxu0
        %v1584 = vadd.f32 %v1388, %v1583
        %v1585 = vpop.f32.mrf.mxu0
        %v1586 = vpop.f32.mrf.mxu0
        %v1587 = vpop.f32.mrf.mxu0
        %1588 = vdwg.mxu0
        %1589 = vmatprep.subr.bf16.mxu0 %v1516
        %1590 = vmatpush1.bf16.xpose.msra.mxu0 %v1515
        %1591 = vmatprep.subr.bf16.mxu0 %v1512
        %1592 = vmatpush1.bf16.xpose.msra.mxu0 %v1511
        %1593 = vmatprep.subr.bf16.mxu0 %v1508
        %1594 = vmatpush1.bf16.xpose.msra.mxu0 %v1507
        %1595 = vmatprep.subr.bf16.mxu0 %v1504
        %1596 = vmatpush1.bf16.xpose.msra.mxu0 %v1503
        %1597 = vmatprep.subr.bf16.mxu0 %v1500
        %1598 = vmatpush1.bf16.xpose.msra.mxu0 %v1499
        %1599 = vmatprep.subr.bf16.mxu0 %v1496
        %1600 = vmatpush1.bf16.xpose.msra.mxu0 %v1495
        %1601 = vmatprep.subr.bf16.mxu0 %v1492
        %1602 = vmatpush1.bf16.xpose.msra.mxu0 %v1491
        %1603 = vmatprep.subr.bf16.mxu0 %v1488
        %1604 = vmatpush1.bf16.xpose.msra.mxu0 %v1487
        %1605 = vmatprep.subr.bf16.mxu0 0
        %1606 = vmatpush2.bf16.xpose.msra.mxu0 0
        %1607 = vmatprep.subr.bf16.mxu0 0
        %1608 = vmatpush2.bf16.xpose.msra.mxu0 0
        %1609 = vmatprep.subr.bf16.mxu0 0
        %1610 = vmatpush2.bf16.xpose.msra.mxu0 0
        %1611 = vmatprep.subr.bf16.mxu0 0
        %1612 = vmatpush2.bf16.xpose.msra.mxu0 0
        %1613 = vmatprep.subr.bf16.mxu0 0
        %1614 = vmatpush2.bf16.xpose.msra.mxu0 0
        %1615 = vmatprep.subr.bf16.mxu0 0
        %1616 = vmatpush2.bf16.xpose.msra.mxu0 0
        %1617 = vmatprep.subr.bf16.mxu0 0
        %1618 = vmatpush2.bf16.xpose.msra.mxu0 0
        %1619 = vmatprep.subr.bf16.mxu0 0
        %1620 = vmatpush2.bf16.xpose.msra.mxu0 0
        %1621 = vmatprep.mubr.bf16.mxu0 %v1350
        %1622 = vmatmul.mubr.bf16.gmra.mxu0 %v1349
        %v1623 = vpop.f32.mrf.mxu0
        %v1624 = vadd.f32 %v1584, %v1623
        %v1625 = vpop.f32.mrf.mxu0
        %v1626 = vpop.f32.mrf.mxu0
        %v1627 = vpop.f32.mrf.mxu0
        %1628 = vdwg.mxu0
        %v1629 = vadd.f32 %v1013, %v1624
        %v1630 = vld [vmem:[#allocation12 + $0x9] sm:$0x1]
        %v1631 = vld [vmem:[#allocation12 + $0xa] sm:$0x1]
        %1632 = vadd.xlane.f32.xlu0 %v1629
        %v1633 = vpop.xlane.xlu0 %1632
        %v1634 = vmul.f32 %v1633, %v425
        %v1635 = vsub.f32 %v1629, %v1634
        %v1636 = vmul.f32 %v1635, %v1635
        %1637 = vadd.xlane.f32.xlu0 %v1636
        %v1638 = vpop.xlane.xlu0 %1637
        %v1639 = vmul.f32 %v1638, %v425
        %v1640 = vadd.f32 %v1639, 1e-12
        %v1641 = vrsqrt.pop %v1640
        %v1642 = vmul.f32 %v1635, %v1641
        %v1643 = vlaneseq
        %v1644 = vshrl.u32 %v1643, 7
        %v1645 = vsub.s32 0, %v1644
        %v1646 = vrot.slane %v1630, %v1645
        %v1647 = vmul.f32 %v1642, %v1646
        %v1648 = vlaneseq
        %v1649 = vshrl.u32 %v1648, 7
        %v1650 = vsub.s32 0, %v1649
        %v1651 = vrot.slane %v1631, %v1650
        %v1652 = vadd.f32 %v1647, %v1651
        %v1653 = vmul.f32 %v1652, 11.313708
        %1654 = vst [vmem:[%s265] sm:$0xff] %v1653
        %s1655 = sand.u32 %s141, 1
        %s1656 = scalar_lea.sflag [#allocation8], %s1655
        %s1657 = sand.u32 %s141, 1
        %s1658 = smul.addr %s1657, 8
        %s1659 = scalar_lea.vmem [#allocation14], %s1658
        // Predicated region
        $region89: #{tpu_custom_call.1} parent=39 // pred_check
          %p1660 = pneg %p151
        $region90: #{tpu_custom_call.1} parent=39 // pred_check_branch
          %1662 = sbr.rel (%p1660) target = $region92
        $region91: #{tpu_custom_call.1} parent=39 // pred_region
          %s1664 = ssub.s32 128, 128
          %1665 = vsyncadd %s1656, %s1664
          %s1666 = smul.addr %s28, 128
          %s1667 = scalar_lea.hbm %s7, %s1666
          %s1669 = sshll.u32 %s1659, 4
          %s1670 = int_to_ptr.vmem [resolvable:$true] %s1669
          %1672 = dma.vmem_to_hbm [thread:$0]  %s1670, 128, %s1667, %s1656
        $region92: #{tpu_custom_call.1} parent=39 // pred_fallthru
          _
      $region40: #{tpu_custom_call.1} parent=5 // pred_fallthru
        _
      %p1673 = scmp.le.s32.totalorder 2, %s23
      // Predicated region
      $region93: #{tpu_custom_call.1} parent=5 // pred_check
        %p1674 = pneg %p1673
      $region94: #{tpu_custom_call.1} parent=5 // pred_check_branch
        %1676 = sbr.rel (%p1674) target = $region96
      $region95: #{tpu_custom_call.1} parent=5 // pred_region
        %s1677 = ssub.s32 %s23, 2
        // Predicated region
        $region97: #{tpu_custom_call.1} parent=95 // pred_check
          %p1678 = pneg %p157
        $region98: #{tpu_custom_call.1} parent=95 // pred_check_branch
          %1680 = sbr.rel (%p1678) target = $region100
        $region99: #{tpu_custom_call.1} parent=95 // pred_region
          %s1681 = sand.u32 %s142, 1
          %s1682 = scalar_lea.sflag [#allocation8], %s1681
          %s1683 = sand.u32 %s142, 1
          %s1684 = smul.addr %s1683, 8
          %s1685 = scalar_lea.vmem [#allocation14], %s1684
          %1686 = dma.done %s1682, 128
        $region100: #{tpu_custom_call.1} parent=95 // pred_fallthru
          _
      $region96: #{tpu_custom_call.1} parent=5 // pred_fallthru
        _
    $region6: #{tpu_custom_call.1} parent=1 // loop_footer
      %s27 = sadd.s32 1, %s23
    $region7: #{tpu_custom_call.1} parent=1 // loop_footer_branch
      %22 = sbr.rel target = $region3
    $region8: #{tpu_custom_call.1} parent=1 // loop_exit
      _
    %1687 = vsyncpa [#allocation7], 1
    %s1688 = scalar_lea.sflag [#allocation7], 1
    %1689 = vsyncpa %s1688, 1
    %1690 = vsyncpa [#allocation10], 1
    %1691 = vsyncpa [#allocation13], 1
    %1692 = vsyncpa [#allocation8], 1
    %s1693 = scalar_lea.sflag [#allocation8], 1
    %1694 = vsyncpa %s1693, 1
  %1695 = vsyncmov [#allocation3]
  %s1696 = vpop.sfrf %1695
  %p1697 = scmp.eq.s32.totalorder %s1696, 0
  %p1698 = pneg %p1697
  %1700 = shalt.err (%p1698)
  %s1701 = scalar_lea.sflag [#allocation3], 1
  %1702 = vsyncmov %s1701
  %s1703 = vpop.sfrf %1702
  %p1704 = scmp.eq.s32.totalorder %s1703, 0
  %p1705 = pneg %p1704
  %1707 = shalt.err (%p1705)
  %s1708 = scalar_lea.sflag [#allocation3], 2
  %1709 = vsyncmov %s1708
  %s1710 = vpop.sfrf %1709
  %p1711 = scmp.eq.s32.totalorder %s1710, 0
  %p1712 = pneg %p1711
  %1714 = shalt.err (%p1712)
  %s1715 = scalar_lea.sflag [#allocation3], 3
  %1716 = vsyncmov %s1715
  %s1717 = vpop.sfrf %1716
  %p1718 = scmp.eq.s32.totalorder %s1717, 0
  %p1719 = pneg %p1718
  %1721 = shalt.err (%p1719)
  %s1722 = scalar_lea.sflag [#allocation3], 4
  %1723 = vsyncmov %s1722
  %s1724 = vpop.sfrf %1723
  %p1725 = scmp.eq.s32.totalorder %s1724, 0
  %p1726 = pneg %p1725
  %1728 = shalt.err (%p1726)
  %s1729 = scalar_lea.sflag [#allocation3], 5
  %1730 = vsyncmov %s1729
  %s1731 = vpop.sfrf %1730
  %p1732 = scmp.eq.s32.totalorder %s1731, 0
  %p1733 = pneg %p1732
  %1735 = shalt.err (%p1733)
  %s1736 = scalar_lea.sflag [#allocation3], 6
  %1737 = vsyncmov %s1736
  %s1738 = vpop.sfrf %1737
  %p1739 = scmp.eq.s32.totalorder %s1738, 0
  %p1740 = pneg %p1739
  %1742 = shalt.err (%p1740)
  %s1743 = scalar_lea.sflag [#allocation3], 7
  %1744 = vsyncmov %s1743
  %s1745 = vpop.sfrf %1744
  %p1746 = scmp.eq.s32.totalorder %s1745, 0
  %p1747 = pneg %p1746
  %1749 = shalt.err (%p1747)

</llo_original>
